<compile_context>
chip_gen: v7x
topology: tpu7x:2x2x1
jax: 0.10.0
libtpu: 0.0.40
codegen_flags: <defaults>
</compile_context>

<pallas_src>
import functools

import jax
import jax.numpy as jnp
from jax.experimental import pallas as pl
from jax.experimental.pallas import tpu as pltpu


def _round_up(x, m):
    return (x + m - 1) // m * m


_LANES = 128      # vreg lane width
_GUARD = 128      # zero guard (>= W + 3) on each side of the flattened image
_N_HEAD = 128     # lane-dense padded width of the merged head output


def _make_kernel(h_img, w_img, c_out, nw):
    """Fused CellStyleNet forward kernel; one batch tile per grid step."""
    wp = w_img + 2                               # padded-image row stride
    inv_hw = 1.0 / float(h_img * w_img)          # TRUE pixel count, not padded
    # Flat-index offset of each 3x3 tap, enumerated as t = dy*3 + dx — this
    # matches reshaping the PyTorch Conv2d weight [C_out, 1, 3, 3] -> [C_out, 9].
    tap_offsets = [(dy - 1) * wp + (dx - 1) for dy in range(3) for dx in range(3)]

    def kernel(img_ref, mask_ref, wconv_ref, bconv_ref,
               w1_ref, b1_ref, wh_ref, bh_ref, out_ref):
        # img_ref  : [TB, NTOT] f32  zero-guarded, flattened, halo-padded images
        # mask_ref : [1, NW]    f32  1.0 at interior pixels, 0.0 at halo/padding
        # wconv_ref: [C_OUT, 9] f32  (SMEM) conv taps
        # bconv_ref: [C_OUT]    f32  (SMEM) conv bias
        # w1_ref   : [C_OUT, D] f32  Linear(8->32) weight (transposed in wrapper)
        # b1_ref   : [1, D]     f32
        # wh_ref   : [D, 128]   f32  [cls(11) | style(2) | I_D (embeddings) | 0]
        # bh_ref   : [1, 128]   f32
        # out_ref  : [TB, 128]  f32  single lane-dense output block
        mask = mask_ref[...]

        # 9 shifted windows of the image (static lane offsets; the front/back
        # zero guards keep every window in bounds).  Shared by all channels.
        wins = [img_ref[:, _GUARD + s:_GUARD + s + nw] for s in tap_offsets]

        # conv(3x3, pad=1) + ReLU + masked GAP + Linear(C_OUT -> D), all fused;
        # pure VPU f32 FMAs — no im2col, no MXU for the conv.
        acc1 = None
        for c in range(c_out):
            conv = wconv_ref[c, 0] * wins[0]
            for t in range(1, 9):
                conv = conv + wconv_ref[c, t] * wins[t]
            act = jnp.maximum(conv + bconv_ref[c], 0.0) * mask      # ReLU + mask
            gap_c = jnp.sum(act, axis=1, keepdims=True) * inv_hw    # [TB, 1]
            contrib = gap_c * w1_ref[c:c + 1, :]                    # [TB, D]
            acc1 = contrib if acc1 is None else acc1 + contrib
        h = jnp.maximum(acc1 + b1_ref[...], 0.0)                    # embeddings

        # classifier + style head + identity(embeddings) merged into one
        # lane-dense MXU matmul and a single unmasked 128-lane store.
        out_ref[...] = (
            jnp.dot(h, wh_ref[...], preferred_element_type=jnp.float32)
            + bh_ref[...])

    return kernel


def cellstylenet_forward(x, params, *, tile_b=8):
    """Fused Pallas forward of CellStyleNet.

    Args:
      x: [B, 1, H, W] float input (NCHW, like the PyTorch module).
      params: dict of PyTorch-layout weights (see __main__).
      tile_b: batch rows per grid step (multiple of 8). For production batches,
        grow this against VMEM per generation (v7x: 64 MiB, v5e/v6e: 128 MiB).
    Returns:
      {'predictions': [B, 11], 'styles': [B, 2], 'embeddings': [B, 32]}
    """
    assert tile_b % 8 == 0
    x = x.astype(jnp.float32)
    b, c_in, h_img, w_img = x.shape
    assert c_in == 1, "canonical feat_ext takes single-channel cell images"
    hp, wp = h_img + 2, w_img + 2
    assert wp + 1 <= _GUARD
    n_pix = hp * wp
    nw = _round_up(n_pix, _LANES)          # lane-dense conv window width
    ntot = _GUARD + nw + _GUARD            # + zero guards for the 9 tap windows

    c_out = params["conv_w"].shape[0]      # 8
    d_emb = params["fc1_w"].shape[0]       # 32
    n_cls = params["cls_w"].shape[0]       # 11
    n_sty = params["sty_w"].shape[0]       # 2
    assert n_cls + n_sty + d_emb <= _N_HEAD

    # ---- wrapper-side layout plumbing (cheap XLA, no compute hoisting) ------
    bp = _round_up(b, tile_b)
    img = jnp.pad(x[:, 0], ((0, bp - b), (1, 1), (1, 1)))     # batch pad + halo
    img = img.reshape(bp, n_pix)
    img = jnp.pad(img, ((0, 0), (_GUARD, ntot - _GUARD - n_pix)))

    f = jnp.arange(nw)
    valid = ((f < n_pix)
             & (f // wp >= 1) & (f // wp <= h_img)
             & (f % wp >= 1) & (f % wp <= w_img))
    mask = valid.astype(jnp.float32)[None, :]                 # [1, NW]

    wconv = params["conv_w"].reshape(c_out, 9).astype(jnp.float32)
    bconv = params["conv_b"].astype(jnp.float32)
    w1 = params["fc1_w"].T.astype(jnp.float32)                # [C_OUT, D]
    b1 = params["fc1_b"].astype(jnp.float32)[None, :]         # [1, D]
    # merged head: [cls | style | identity (embeddings) | zero pad] -> 128 lanes
    wh = jnp.concatenate(
        [params["cls_w"].T.astype(jnp.float32),
         params["sty_w"].T.astype(jnp.float32),
         jnp.eye(d_emb, dtype=jnp.float32),
         jnp.zeros((d_emb, _N_HEAD - n_cls - n_sty - d_emb), jnp.float32)],
        axis=1)
    bh = jnp.concatenate(
        [params["cls_b"].astype(jnp.float32),
         params["sty_b"].astype(jnp.float32),
         jnp.zeros((_N_HEAD - n_cls - n_sty,), jnp.float32)])[None, :]

    kernel = _make_kernel(h_img, w_img, c_out, nw)

    out = pl.pallas_call(
        kernel,
        out_shape=jax.ShapeDtypeStruct((bp, _N_HEAD), jnp.float32),
        grid=(bp // tile_b,),
        in_specs=[
            pl.BlockSpec((tile_b, ntot), lambda i: (i, 0)),        # image tiles
            pl.BlockSpec((1, nw), lambda i: (0, 0)),               # GAP mask
            pl.BlockSpec(memory_space=pltpu.MemorySpace.SMEM),     # conv taps
            pl.BlockSpec(memory_space=pltpu.MemorySpace.SMEM),     # conv bias
            pl.BlockSpec((c_out, d_emb), lambda i: (0, 0)),        # fc1 weight
            pl.BlockSpec((1, d_emb), lambda i: (0, 0)),            # fc1 bias
            pl.BlockSpec((d_emb, _N_HEAD), lambda i: (0, 0)),      # merged head W
            pl.BlockSpec((1, _N_HEAD), lambda i: (0, 0)),          # merged head b
        ],
        out_specs=pl.BlockSpec((tile_b, _N_HEAD), lambda i: (i, 0)),
        compiler_params=pltpu.CompilerParams(
            dimension_semantics=("parallel",),     # v7x: shard batch tiles on 2 TCs
            vmem_limit_bytes=48 * 1024 * 1024,     # safe under v7x's 64 MiB VMEM
        ),
    )(img, mask, wconv, bconv, w1, b1, wh, bh)

    out = out[:b]
    return {
        "predictions": out[:, :n_cls],
        "styles": out[:, n_cls:n_cls + n_sty],
        "embeddings": out[:, n_cls + n_sty:n_cls + n_sty + d_emb],
    }


def reference_forward(x, params):
    """Pure-JAX reference matching the PyTorch module semantics."""
    xin = x[:, 0].astype(jnp.float32)
    _, h_img, w_img = xin.shape
    xp = jnp.pad(xin, ((0, 0), (1, 1), (1, 1)))
    cw = params["conv_w"].astype(jnp.float32)
    cb = params["conv_b"].astype(jnp.float32)
    conv = None
    for dy in range(3):
        for dx in range(3):
            win = xp[:, dy:dy + h_img, dx:dx + w_img]               # [B, H, W]
            term = cw[:, 0, dy, dx][None, :, None, None] * win[:, None]
            conv = term if conv is None else conv + term
    conv = jax.nn.relu(conv + cb[None, :, None, None])
    gap = conv.mean(axis=(2, 3))                                    # [B, C_OUT]
    h = jax.nn.relu(gap @ params["fc1_w"].T.astype(jnp.float32)
                    + params["fc1_b"].astype(jnp.float32))
    preds = (h @ params["cls_w"].T.astype(jnp.float32)
             + params["cls_b"].astype(jnp.float32))
    styles = (h @ params["sty_w"].T.astype(jnp.float32)
              + params["sty_b"].astype(jnp.float32))
    return {"predictions": preds, "styles": styles, "embeddings": h}


if __name__ == "__main__":
    key = jax.random.PRNGKey(0)
    kx, k1, k2, k3, k4, k5, k6, k7, k8 = jax.random.split(key, 9)
    b, h_img, w_img = 12, 16, 16
    c_out, d_emb, n_cls, n_sty = 8, 32, 11, 2
    x = jax.random.normal(kx, (b, 1, h_img, w_img), jnp.float32)
    params = {
        "conv_w": 0.5 * jax.random.normal(k1, (c_out, 1, 3, 3), jnp.float32),
        "conv_b": 0.1 * jax.random.normal(k2, (c_out,), jnp.float32),
        "fc1_w": 0.3 * jax.random.normal(k3, (d_emb, c_out), jnp.float32),
        "fc1_b": 0.1 * jax.random.normal(k4, (d_emb,), jnp.float32),
        "cls_w": 0.3 * jax.random.normal(k5, (n_cls, d_emb), jnp.float32),
        "cls_b": 0.1 * jax.random.normal(k6, (n_cls,), jnp.float32),
        "sty_w": 0.3 * jax.random.normal(k7, (n_sty, d_emb), jnp.float32),
        "sty_b": 0.1 * jax.random.normal(k8, (n_sty,), jnp.float32),
    }

    fwd = jax.jit(functools.partial(cellstylenet_forward, tile_b=8))
    out = jax.block_until_ready(fwd(x, params))

    ref = jax.block_until_ready(jax.jit(reference_forward)(x, params))
    for name in ("predictions", "styles", "embeddings"):
        assert out[name].shape == ref[name].shape, (
            name, out[name].shape, ref[name].shape)
        err = float(jnp.max(jnp.abs(out[name] - ref[name])))
        assert err < 5e-2, f"{name} mismatch, max abs err = {err}"

    print("KERNEL_OK")
</pallas_src>

<mosaic_0001>
module attributes {stable_mosaic.version = 11 : i64} {
  func.func @kernel(%arg0: i32, %arg1: memref<8x640xf32, #tpu.memory_space<vmem>>, %arg2: memref<1x384xf32, #tpu.memory_space<vmem>>, %arg3: memref<8x9xf32, #tpu.memory_space<smem>>, %arg4: memref<8xf32, #tpu.memory_space<smem>>, %arg5: memref<8x32xf32, #tpu.memory_space<vmem>>, %arg6: memref<1x32xf32, #tpu.memory_space<vmem>>, %arg7: memref<32x128xf32, #tpu.memory_space<vmem>>, %arg8: memref<1x128xf32, #tpu.memory_space<vmem>>, %arg9: memref<8x128xf32, #tpu.memory_space<vmem>>) attributes {dimension_semantics = [#tpu.dimension_semantics<parallel>], iteration_bounds = array<i64: 2>, scalar_prefetch = 0 : i64, scratch_operands = 0 : i64, tpu.core_type = #tpu.core_type<tc>, window_params = [{transform_indices = @transform_0, window_bounds = array<i64: 8, 640>}, {pipeline_mode = #tpu.pipeline_mode<synchronous>, transform_indices = @transform_1, window_bounds = array<i64: 1, 384>}, {transform_indices = @transform_2, window_bounds = array<i64: 8, 9>}, {transform_indices = @transform_3, window_bounds = array<i64: 8>}, {pipeline_mode = #tpu.pipeline_mode<synchronous>, transform_indices = @transform_4, window_bounds = array<i64: 8, 32>}, {pipeline_mode = #tpu.pipeline_mode<synchronous>, transform_indices = @transform_5, window_bounds = array<i64: 1, 32>}, {pipeline_mode = #tpu.pipeline_mode<synchronous>, transform_indices = @transform_6, window_bounds = array<i64: 32, 128>}, {pipeline_mode = #tpu.pipeline_mode<synchronous>, transform_indices = @transform_7, window_bounds = array<i64: 1, 128>}, {transform_indices = @transform_8, window_bounds = array<i64: 8, 128>}]} {
    %c0 = arith.constant 0 : index
    %c0_0 = arith.constant 0 : index
    %0 = vector.load %arg2[%c0, %c0_0] : memref<1x384xf32, #tpu.memory_space<vmem>>, vector<1x384xf32>
    %c0_1 = arith.constant 0 : index
    %c109 = arith.constant 109 : index
    %1 = vector.load %arg1[%c0_1, %c109] : memref<8x640xf32, #tpu.memory_space<vmem>>, vector<8x384xf32>
    %c0_2 = arith.constant 0 : index
    %c110 = arith.constant 110 : index
    %2 = vector.load %arg1[%c0_2, %c110] : memref<8x640xf32, #tpu.memory_space<vmem>>, vector<8x384xf32>
    %c0_3 = arith.constant 0 : index
    %c111 = arith.constant 111 : index
    %3 = vector.load %arg1[%c0_3, %c111] : memref<8x640xf32, #tpu.memory_space<vmem>>, vector<8x384xf32>
    %c0_4 = arith.constant 0 : index
    %c127 = arith.constant 127 : index
    %4 = vector.load %arg1[%c0_4, %c127] : memref<8x640xf32, #tpu.memory_space<vmem>>, vector<8x384xf32>
    %c0_5 = arith.constant 0 : index
    %c128 = arith.constant 128 : index
    %5 = vector.load %arg1[%c0_5, %c128] : memref<8x640xf32, #tpu.memory_space<vmem>>, vector<8x384xf32>
    %c0_6 = arith.constant 0 : index
    %c129 = arith.constant 129 : index
    %6 = vector.load %arg1[%c0_6, %c129] : memref<8x640xf32, #tpu.memory_space<vmem>>, vector<8x384xf32>
    %c0_7 = arith.constant 0 : index
    %c145 = arith.constant 145 : index
    %7 = vector.load %arg1[%c0_7, %c145] : memref<8x640xf32, #tpu.memory_space<vmem>>, vector<8x384xf32>
    %c0_8 = arith.constant 0 : index
    %c146 = arith.constant 146 : index
    %8 = vector.load %arg1[%c0_8, %c146] : memref<8x640xf32, #tpu.memory_space<vmem>>, vector<8x384xf32>
    %c0_9 = arith.constant 0 : index
    %c147 = arith.constant 147 : index
    %9 = vector.load %arg1[%c0_9, %c147] : memref<8x640xf32, #tpu.memory_space<vmem>>, vector<8x384xf32>
    %c0_10 = arith.constant 0 : index
    %c0_11 = arith.constant 0 : index
    %10 = memref.load %arg3[%c0_10, %c0_11] : memref<8x9xf32, #tpu.memory_space<smem>>
    %11 = vector.broadcast %10 : f32 to vector<8x384xf32>
    %12 = arith.mulf %11, %1 : vector<8x384xf32>
    %c0_12 = arith.constant 0 : index
    %c1 = arith.constant 1 : index
    %13 = memref.load %arg3[%c0_12, %c1] : memref<8x9xf32, #tpu.memory_space<smem>>
    %14 = vector.broadcast %13 : f32 to vector<8x384xf32>
    %15 = arith.mulf %14, %2 : vector<8x384xf32>
    %16 = arith.addf %12, %15 : vector<8x384xf32>
    %c0_13 = arith.constant 0 : index
    %c2 = arith.constant 2 : index
    %17 = memref.load %arg3[%c0_13, %c2] : memref<8x9xf32, #tpu.memory_space<smem>>
    %18 = vector.broadcast %17 : f32 to vector<8x384xf32>
    %19 = arith.mulf %18, %3 : vector<8x384xf32>
    %20 = arith.addf %16, %19 : vector<8x384xf32>
    %c0_14 = arith.constant 0 : index
    %c3 = arith.constant 3 : index
    %21 = memref.load %arg3[%c0_14, %c3] : memref<8x9xf32, #tpu.memory_space<smem>>
    %22 = vector.broadcast %21 : f32 to vector<8x384xf32>
    %23 = arith.mulf %22, %4 : vector<8x384xf32>
    %24 = arith.addf %20, %23 : vector<8x384xf32>
    %c0_15 = arith.constant 0 : index
    %c4 = arith.constant 4 : index
    %25 = memref.load %arg3[%c0_15, %c4] : memref<8x9xf32, #tpu.memory_space<smem>>
    %26 = vector.broadcast %25 : f32 to vector<8x384xf32>
    %27 = arith.mulf %26, %5 : vector<8x384xf32>
    %28 = arith.addf %24, %27 : vector<8x384xf32>
    %c0_16 = arith.constant 0 : index
    %c5 = arith.constant 5 : index
    %29 = memref.load %arg3[%c0_16, %c5] : memref<8x9xf32, #tpu.memory_space<smem>>
    %30 = vector.broadcast %29 : f32 to vector<8x384xf32>
    %31 = arith.mulf %30, %6 : vector<8x384xf32>
    %32 = arith.addf %28, %31 : vector<8x384xf32>
    %c0_17 = arith.constant 0 : index
    %c6 = arith.constant 6 : index
    %33 = memref.load %arg3[%c0_17, %c6] : memref<8x9xf32, #tpu.memory_space<smem>>
    %34 = vector.broadcast %33 : f32 to vector<8x384xf32>
    %35 = arith.mulf %34, %7 : vector<8x384xf32>
    %36 = arith.addf %32, %35 : vector<8x384xf32>
    %c0_18 = arith.constant 0 : index
    %c7 = arith.constant 7 : index
    %37 = memref.load %arg3[%c0_18, %c7] : memref<8x9xf32, #tpu.memory_space<smem>>
    %38 = vector.broadcast %37 : f32 to vector<8x384xf32>
    %39 = arith.mulf %38, %8 : vector<8x384xf32>
    %40 = arith.addf %36, %39 : vector<8x384xf32>
    %c0_19 = arith.constant 0 : index
    %c8 = arith.constant 8 : index
    %41 = memref.load %arg3[%c0_19, %c8] : memref<8x9xf32, #tpu.memory_space<smem>>
    %42 = vector.broadcast %41 : f32 to vector<8x384xf32>
    %43 = arith.mulf %42, %9 : vector<8x384xf32>
    %44 = arith.addf %40, %43 : vector<8x384xf32>
    %c0_20 = arith.constant 0 : index
    %45 = memref.load %arg4[%c0_20] : memref<8xf32, #tpu.memory_space<smem>>
    %46 = vector.broadcast %45 : f32 to vector<8x384xf32>
    %47 = arith.addf %44, %46 : vector<8x384xf32>
    %cst = arith.constant 0.000000e+00 : f32
    %48 = vector.broadcast %cst : f32 to vector<8x384xf32>
    %49 = arith.maximumf %47, %48 : vector<8x384xf32>
    %50 = vector.broadcast %0 : vector<1x384xf32> to vector<8x384xf32>
    %51 = arith.mulf %49, %50 : vector<8x384xf32>
    %cst_21 = arith.constant dense<0.000000e+00> : vector<8xf32>
    %52 = vector.multi_reduction <add>, %51, %cst_21 [1] : vector<8x384xf32> to vector<8xf32>
    %53 = vector.shape_cast %52 : vector<8xf32> to vector<8x1xf32>
    %cst_22 = arith.constant 3.906250e-03 : f32
    %54 = vector.broadcast %cst_22 : f32 to vector<8x1xf32>
    %55 = arith.mulf %53, %54 : vector<8x1xf32>
    %c0_23 = arith.constant 0 : index
    %c0_24 = arith.constant 0 : index
    %56 = vector.load %arg5[%c0_23, %c0_24] : memref<8x32xf32, #tpu.memory_space<vmem>>, vector<1x32xf32>
    %57 = vector.broadcast %55 : vector<8x1xf32> to vector<8x32xf32>
    %58 = vector.broadcast %56 : vector<1x32xf32> to vector<8x32xf32>
    %59 = arith.mulf %57, %58 : vector<8x32xf32>
    %c1_25 = arith.constant 1 : index
    %c0_26 = arith.constant 0 : index
    %60 = memref.load %arg3[%c1_25, %c0_26] : memref<8x9xf32, #tpu.memory_space<smem>>
    %61 = vector.broadcast %60 : f32 to vector<8x384xf32>
    %62 = arith.mulf %61, %1 : vector<8x384xf32>
    %c1_27 = arith.constant 1 : index
    %c1_28 = arith.constant 1 : index
    %63 = memref.load %arg3[%c1_27, %c1_28] : memref<8x9xf32, #tpu.memory_space<smem>>
    %64 = vector.broadcast %63 : f32 to vector<8x384xf32>
    %65 = arith.mulf %64, %2 : vector<8x384xf32>
    %66 = arith.addf %62, %65 : vector<8x384xf32>
    %c1_29 = arith.constant 1 : index
    %c2_30 = arith.constant 2 : index
    %67 = memref.load %arg3[%c1_29, %c2_30] : memref<8x9xf32, #tpu.memory_space<smem>>
    %68 = vector.broadcast %67 : f32 to vector<8x384xf32>
    %69 = arith.mulf %68, %3 : vector<8x384xf32>
    %70 = arith.addf %66, %69 : vector<8x384xf32>
    %c1_31 = arith.constant 1 : index
    %c3_32 = arith.constant 3 : index
    %71 = memref.load %arg3[%c1_31, %c3_32] : memref<8x9xf32, #tpu.memory_space<smem>>
    %72 = vector.broadcast %71 : f32 to vector<8x384xf32>
    %73 = arith.mulf %72, %4 : vector<8x384xf32>
    %74 = arith.addf %70, %73 : vector<8x384xf32>
    %c1_33 = arith.constant 1 : index
    %c4_34 = arith.constant 4 : index
    %75 = memref.load %arg3[%c1_33, %c4_34] : memref<8x9xf32, #tpu.memory_space<smem>>
    %76 = vector.broadcast %75 : f32 to vector<8x384xf32>
    %77 = arith.mulf %76, %5 : vector<8x384xf32>
    %78 = arith.addf %74, %77 : vector<8x384xf32>
    %c1_35 = arith.constant 1 : index
    %c5_36 = arith.constant 5 : index
    %79 = memref.load %arg3[%c1_35, %c5_36] : memref<8x9xf32, #tpu.memory_space<smem>>
    %80 = vector.broadcast %79 : f32 to vector<8x384xf32>
    %81 = arith.mulf %80, %6 : vector<8x384xf32>
    %82 = arith.addf %78, %81 : vector<8x384xf32>
    %c1_37 = arith.constant 1 : index
    %c6_38 = arith.constant 6 : index
    %83 = memref.load %arg3[%c1_37, %c6_38] : memref<8x9xf32, #tpu.memory_space<smem>>
    %84 = vector.broadcast %83 : f32 to vector<8x384xf32>
    %85 = arith.mulf %84, %7 : vector<8x384xf32>
    %86 = arith.addf %82, %85 : vector<8x384xf32>
    %c1_39 = arith.constant 1 : index
    %c7_40 = arith.constant 7 : index
    %87 = memref.load %arg3[%c1_39, %c7_40] : memref<8x9xf32, #tpu.memory_space<smem>>
    %88 = vector.broadcast %87 : f32 to vector<8x384xf32>
    %89 = arith.mulf %88, %8 : vector<8x384xf32>
    %90 = arith.addf %86, %89 : vector<8x384xf32>
    %c1_41 = arith.constant 1 : index
    %c8_42 = arith.constant 8 : index
    %91 = memref.load %arg3[%c1_41, %c8_42] : memref<8x9xf32, #tpu.memory_space<smem>>
    %92 = vector.broadcast %91 : f32 to vector<8x384xf32>
    %93 = arith.mulf %92, %9 : vector<8x384xf32>
    %94 = arith.addf %90, %93 : vector<8x384xf32>
    %c1_43 = arith.constant 1 : index
    %95 = memref.load %arg4[%c1_43] : memref<8xf32, #tpu.memory_space<smem>>
    %96 = vector.broadcast %95 : f32 to vector<8x384xf32>
    %97 = arith.addf %94, %96 : vector<8x384xf32>
    %cst_44 = arith.constant 0.000000e+00 : f32
    %98 = vector.broadcast %cst_44 : f32 to vector<8x384xf32>
    %99 = arith.maximumf %97, %98 : vector<8x384xf32>
    %100 = vector.broadcast %0 : vector<1x384xf32> to vector<8x384xf32>
    %101 = arith.mulf %99, %100 : vector<8x384xf32>
    %cst_45 = arith.constant dense<0.000000e+00> : vector<8xf32>
    %102 = vector.multi_reduction <add>, %101, %cst_45 [1] : vector<8x384xf32> to vector<8xf32>
    %103 = vector.shape_cast %102 : vector<8xf32> to vector<8x1xf32>
    %cst_46 = arith.constant 3.906250e-03 : f32
    %104 = vector.broadcast %cst_46 : f32 to vector<8x1xf32>
    %105 = arith.mulf %103, %104 : vector<8x1xf32>
    %c1_47 = arith.constant 1 : index
    %c0_48 = arith.constant 0 : index
    %106 = vector.load %arg5[%c1_47, %c0_48] : memref<8x32xf32, #tpu.memory_space<vmem>>, vector<1x32xf32>
    %107 = vector.broadcast %105 : vector<8x1xf32> to vector<8x32xf32>
    %108 = vector.broadcast %106 : vector<1x32xf32> to vector<8x32xf32>
    %109 = arith.mulf %107, %108 : vector<8x32xf32>
    %110 = arith.addf %59, %109 : vector<8x32xf32>
    %c2_49 = arith.constant 2 : index
    %c0_50 = arith.constant 0 : index
    %111 = memref.load %arg3[%c2_49, %c0_50] : memref<8x9xf32, #tpu.memory_space<smem>>
    %112 = vector.broadcast %111 : f32 to vector<8x384xf32>
    %113 = arith.mulf %112, %1 : vector<8x384xf32>
    %c2_51 = arith.constant 2 : index
    %c1_52 = arith.constant 1 : index
    %114 = memref.load %arg3[%c2_51, %c1_52] : memref<8x9xf32, #tpu.memory_space<smem>>
    %115 = vector.broadcast %114 : f32 to vector<8x384xf32>
    %116 = arith.mulf %115, %2 : vector<8x384xf32>
    %117 = arith.addf %113, %116 : vector<8x384xf32>
    %c2_53 = arith.constant 2 : index
    %c2_54 = arith.constant 2 : index
    %118 = memref.load %arg3[%c2_53, %c2_54] : memref<8x9xf32, #tpu.memory_space<smem>>
    %119 = vector.broadcast %118 : f32 to vector<8x384xf32>
    %120 = arith.mulf %119, %3 : vector<8x384xf32>
    %121 = arith.addf %117, %120 : vector<8x384xf32>
    %c2_55 = arith.constant 2 : index
    %c3_56 = arith.constant 3 : index
    %122 = memref.load %arg3[%c2_55, %c3_56] : memref<8x9xf32, #tpu.memory_space<smem>>
    %123 = vector.broadcast %122 : f32 to vector<8x384xf32>
    %124 = arith.mulf %123, %4 : vector<8x384xf32>
    %125 = arith.addf %121, %124 : vector<8x384xf32>
    %c2_57 = arith.constant 2 : index
    %c4_58 = arith.constant 4 : index
    %126 = memref.load %arg3[%c2_57, %c4_58] : memref<8x9xf32, #tpu.memory_space<smem>>
    %127 = vector.broadcast %126 : f32 to vector<8x384xf32>
    %128 = arith.mulf %127, %5 : vector<8x384xf32>
    %129 = arith.addf %125, %128 : vector<8x384xf32>
    %c2_59 = arith.constant 2 : index
    %c5_60 = arith.constant 5 : index
    %130 = memref.load %arg3[%c2_59, %c5_60] : memref<8x9xf32, #tpu.memory_space<smem>>
    %131 = vector.broadcast %130 : f32 to vector<8x384xf32>
    %132 = arith.mulf %131, %6 : vector<8x384xf32>
    %133 = arith.addf %129, %132 : vector<8x384xf32>
    %c2_61 = arith.constant 2 : index
    %c6_62 = arith.constant 6 : index
    %134 = memref.load %arg3[%c2_61, %c6_62] : memref<8x9xf32, #tpu.memory_space<smem>>
    %135 = vector.broadcast %134 : f32 to vector<8x384xf32>
    %136 = arith.mulf %135, %7 : vector<8x384xf32>
    %137 = arith.addf %133, %136 : vector<8x384xf32>
    %c2_63 = arith.constant 2 : index
    %c7_64 = arith.constant 7 : index
    %138 = memref.load %arg3[%c2_63, %c7_64] : memref<8x9xf32, #tpu.memory_space<smem>>
    %139 = vector.broadcast %138 : f32 to vector<8x384xf32>
    %140 = arith.mulf %139, %8 : vector<8x384xf32>
    %141 = arith.addf %137, %140 : vector<8x384xf32>
    %c2_65 = arith.constant 2 : index
    %c8_66 = arith.constant 8 : index
    %142 = memref.load %arg3[%c2_65, %c8_66] : memref<8x9xf32, #tpu.memory_space<smem>>
    %143 = vector.broadcast %142 : f32 to vector<8x384xf32>
    %144 = arith.mulf %143, %9 : vector<8x384xf32>
    %145 = arith.addf %141, %144 : vector<8x384xf32>
    %c2_67 = arith.constant 2 : index
    %146 = memref.load %arg4[%c2_67] : memref<8xf32, #tpu.memory_space<smem>>
    %147 = vector.broadcast %146 : f32 to vector<8x384xf32>
    %148 = arith.addf %145, %147 : vector<8x384xf32>
    %cst_68 = arith.constant 0.000000e+00 : f32
    %149 = vector.broadcast %cst_68 : f32 to vector<8x384xf32>
    %150 = arith.maximumf %148, %149 : vector<8x384xf32>
    %151 = vector.broadcast %0 : vector<1x384xf32> to vector<8x384xf32>
    %152 = arith.mulf %150, %151 : vector<8x384xf32>
    %cst_69 = arith.constant dense<0.000000e+00> : vector<8xf32>
    %153 = vector.multi_reduction <add>, %152, %cst_69 [1] : vector<8x384xf32> to vector<8xf32>
    %154 = vector.shape_cast %153 : vector<8xf32> to vector<8x1xf32>
    %cst_70 = arith.constant 3.906250e-03 : f32
    %155 = vector.broadcast %cst_70 : f32 to vector<8x1xf32>
    %156 = arith.mulf %154, %155 : vector<8x1xf32>
    %c2_71 = arith.constant 2 : index
    %c0_72 = arith.constant 0 : index
    %157 = vector.load %arg5[%c2_71, %c0_72] : memref<8x32xf32, #tpu.memory_space<vmem>>, vector<1x32xf32>
    %158 = vector.broadcast %156 : vector<8x1xf32> to vector<8x32xf32>
    %159 = vector.broadcast %157 : vector<1x32xf32> to vector<8x32xf32>
    %160 = arith.mulf %158, %159 : vector<8x32xf32>
    %161 = arith.addf %110, %160 : vector<8x32xf32>
    %c3_73 = arith.constant 3 : index
    %c0_74 = arith.constant 0 : index
    %162 = memref.load %arg3[%c3_73, %c0_74] : memref<8x9xf32, #tpu.memory_space<smem>>
    %163 = vector.broadcast %162 : f32 to vector<8x384xf32>
    %164 = arith.mulf %163, %1 : vector<8x384xf32>
    %c3_75 = arith.constant 3 : index
    %c1_76 = arith.constant 1 : index
    %165 = memref.load %arg3[%c3_75, %c1_76] : memref<8x9xf32, #tpu.memory_space<smem>>
    %166 = vector.broadcast %165 : f32 to vector<8x384xf32>
    %167 = arith.mulf %166, %2 : vector<8x384xf32>
    %168 = arith.addf %164, %167 : vector<8x384xf32>
    %c3_77 = arith.constant 3 : index
    %c2_78 = arith.constant 2 : index
    %169 = memref.load %arg3[%c3_77, %c2_78] : memref<8x9xf32, #tpu.memory_space<smem>>
    %170 = vector.broadcast %169 : f32 to vector<8x384xf32>
    %171 = arith.mulf %170, %3 : vector<8x384xf32>
    %172 = arith.addf %168, %171 : vector<8x384xf32>
    %c3_79 = arith.constant 3 : index
    %c3_80 = arith.constant 3 : index
    %173 = memref.load %arg3[%c3_79, %c3_80] : memref<8x9xf32, #tpu.memory_space<smem>>
    %174 = vector.broadcast %173 : f32 to vector<8x384xf32>
    %175 = arith.mulf %174, %4 : vector<8x384xf32>
    %176 = arith.addf %172, %175 : vector<8x384xf32>
    %c3_81 = arith.constant 3 : index
    %c4_82 = arith.constant 4 : index
    %177 = memref.load %arg3[%c3_81, %c4_82] : memref<8x9xf32, #tpu.memory_space<smem>>
    %178 = vector.broadcast %177 : f32 to vector<8x384xf32>
    %179 = arith.mulf %178, %5 : vector<8x384xf32>
    %180 = arith.addf %176, %179 : vector<8x384xf32>
    %c3_83 = arith.constant 3 : index
    %c5_84 = arith.constant 5 : index
    %181 = memref.load %arg3[%c3_83, %c5_84] : memref<8x9xf32, #tpu.memory_space<smem>>
    %182 = vector.broadcast %181 : f32 to vector<8x384xf32>
    %183 = arith.mulf %182, %6 : vector<8x384xf32>
    %184 = arith.addf %180, %183 : vector<8x384xf32>
    %c3_85 = arith.constant 3 : index
    %c6_86 = arith.constant 6 : index
    %185 = memref.load %arg3[%c3_85, %c6_86] : memref<8x9xf32, #tpu.memory_space<smem>>
    %186 = vector.broadcast %185 : f32 to vector<8x384xf32>
    %187 = arith.mulf %186, %7 : vector<8x384xf32>
    %188 = arith.addf %184, %187 : vector<8x384xf32>
    %c3_87 = arith.constant 3 : index
    %c7_88 = arith.constant 7 : index
    %189 = memref.load %arg3[%c3_87, %c7_88] : memref<8x9xf32, #tpu.memory_space<smem>>
    %190 = vector.broadcast %189 : f32 to vector<8x384xf32>
    %191 = arith.mulf %190, %8 : vector<8x384xf32>
    %192 = arith.addf %188, %191 : vector<8x384xf32>
    %c3_89 = arith.constant 3 : index
    %c8_90 = arith.constant 8 : index
    %193 = memref.load %arg3[%c3_89, %c8_90] : memref<8x9xf32, #tpu.memory_space<smem>>
    %194 = vector.broadcast %193 : f32 to vector<8x384xf32>
    %195 = arith.mulf %194, %9 : vector<8x384xf32>
    %196 = arith.addf %192, %195 : vector<8x384xf32>
    %c3_91 = arith.constant 3 : index
    %197 = memref.load %arg4[%c3_91] : memref<8xf32, #tpu.memory_space<smem>>
    %198 = vector.broadcast %197 : f32 to vector<8x384xf32>
    %199 = arith.addf %196, %198 : vector<8x384xf32>
    %cst_92 = arith.constant 0.000000e+00 : f32
    %200 = vector.broadcast %cst_92 : f32 to vector<8x384xf32>
    %201 = arith.maximumf %199, %200 : vector<8x384xf32>
    %202 = vector.broadcast %0 : vector<1x384xf32> to vector<8x384xf32>
    %203 = arith.mulf %201, %202 : vector<8x384xf32>
    %cst_93 = arith.constant dense<0.000000e+00> : vector<8xf32>
    %204 = vector.multi_reduction <add>, %203, %cst_93 [1] : vector<8x384xf32> to vector<8xf32>
    %205 = vector.shape_cast %204 : vector<8xf32> to vector<8x1xf32>
    %cst_94 = arith.constant 3.906250e-03 : f32
    %206 = vector.broadcast %cst_94 : f32 to vector<8x1xf32>
    %207 = arith.mulf %205, %206 : vector<8x1xf32>
    %c3_95 = arith.constant 3 : index
    %c0_96 = arith.constant 0 : index
    %208 = vector.load %arg5[%c3_95, %c0_96] : memref<8x32xf32, #tpu.memory_space<vmem>>, vector<1x32xf32>
    %209 = vector.broadcast %207 : vector<8x1xf32> to vector<8x32xf32>
    %210 = vector.broadcast %208 : vector<1x32xf32> to vector<8x32xf32>
    %211 = arith.mulf %209, %210 : vector<8x32xf32>
    %212 = arith.addf %161, %211 : vector<8x32xf32>
    %c4_97 = arith.constant 4 : index
    %c0_98 = arith.constant 0 : index
    %213 = memref.load %arg3[%c4_97, %c0_98] : memref<8x9xf32, #tpu.memory_space<smem>>
    %214 = vector.broadcast %213 : f32 to vector<8x384xf32>
    %215 = arith.mulf %214, %1 : vector<8x384xf32>
    %c4_99 = arith.constant 4 : index
    %c1_100 = arith.constant 1 : index
    %216 = memref.load %arg3[%c4_99, %c1_100] : memref<8x9xf32, #tpu.memory_space<smem>>
    %217 = vector.broadcast %216 : f32 to vector<8x384xf32>
    %218 = arith.mulf %217, %2 : vector<8x384xf32>
    %219 = arith.addf %215, %218 : vector<8x384xf32>
    %c4_101 = arith.constant 4 : index
    %c2_102 = arith.constant 2 : index
    %220 = memref.load %arg3[%c4_101, %c2_102] : memref<8x9xf32, #tpu.memory_space<smem>>
    %221 = vector.broadcast %220 : f32 to vector<8x384xf32>
    %222 = arith.mulf %221, %3 : vector<8x384xf32>
    %223 = arith.addf %219, %222 : vector<8x384xf32>
    %c4_103 = arith.constant 4 : index
    %c3_104 = arith.constant 3 : index
    %224 = memref.load %arg3[%c4_103, %c3_104] : memref<8x9xf32, #tpu.memory_space<smem>>
    %225 = vector.broadcast %224 : f32 to vector<8x384xf32>
    %226 = arith.mulf %225, %4 : vector<8x384xf32>
    %227 = arith.addf %223, %226 : vector<8x384xf32>
    %c4_105 = arith.constant 4 : index
    %c4_106 = arith.constant 4 : index
    %228 = memref.load %arg3[%c4_105, %c4_106] : memref<8x9xf32, #tpu.memory_space<smem>>
    %229 = vector.broadcast %228 : f32 to vector<8x384xf32>
    %230 = arith.mulf %229, %5 : vector<8x384xf32>
    %231 = arith.addf %227, %230 : vector<8x384xf32>
    %c4_107 = arith.constant 4 : index
    %c5_108 = arith.constant 5 : index
    %232 = memref.load %arg3[%c4_107, %c5_108] : memref<8x9xf32, #tpu.memory_space<smem>>
    %233 = vector.broadcast %232 : f32 to vector<8x384xf32>
    %234 = arith.mulf %233, %6 : vector<8x384xf32>
    %235 = arith.addf %231, %234 : vector<8x384xf32>
    %c4_109 = arith.constant 4 : index
    %c6_110 = arith.constant 6 : index
    %236 = memref.load %arg3[%c4_109, %c6_110] : memref<8x9xf32, #tpu.memory_space<smem>>
    %237 = vector.broadcast %236 : f32 to vector<8x384xf32>
    %238 = arith.mulf %237, %7 : vector<8x384xf32>
    %239 = arith.addf %235, %238 : vector<8x384xf32>
    %c4_111 = arith.constant 4 : index
    %c7_112 = arith.constant 7 : index
    %240 = memref.load %arg3[%c4_111, %c7_112] : memref<8x9xf32, #tpu.memory_space<smem>>
    %241 = vector.broadcast %240 : f32 to vector<8x384xf32>
    %242 = arith.mulf %241, %8 : vector<8x384xf32>
    %243 = arith.addf %239, %242 : vector<8x384xf32>
    %c4_113 = arith.constant 4 : index
    %c8_114 = arith.constant 8 : index
    %244 = memref.load %arg3[%c4_113, %c8_114] : memref<8x9xf32, #tpu.memory_space<smem>>
    %245 = vector.broadcast %244 : f32 to vector<8x384xf32>
    %246 = arith.mulf %245, %9 : vector<8x384xf32>
    %247 = arith.addf %243, %246 : vector<8x384xf32>
    %c4_115 = arith.constant 4 : index
    %248 = memref.load %arg4[%c4_115] : memref<8xf32, #tpu.memory_space<smem>>
    %249 = vector.broadcast %248 : f32 to vector<8x384xf32>
    %250 = arith.addf %247, %249 : vector<8x384xf32>
    %cst_116 = arith.constant 0.000000e+00 : f32
    %251 = vector.broadcast %cst_116 : f32 to vector<8x384xf32>
    %252 = arith.maximumf %250, %251 : vector<8x384xf32>
    %253 = vector.broadcast %0 : vector<1x384xf32> to vector<8x384xf32>
    %254 = arith.mulf %252, %253 : vector<8x384xf32>
    %cst_117 = arith.constant dense<0.000000e+00> : vector<8xf32>
    %255 = vector.multi_reduction <add>, %254, %cst_117 [1] : vector<8x384xf32> to vector<8xf32>
    %256 = vector.shape_cast %255 : vector<8xf32> to vector<8x1xf32>
    %cst_118 = arith.constant 3.906250e-03 : f32
    %257 = vector.broadcast %cst_118 : f32 to vector<8x1xf32>
    %258 = arith.mulf %256, %257 : vector<8x1xf32>
    %c4_119 = arith.constant 4 : index
    %c0_120 = arith.constant 0 : index
    %259 = vector.load %arg5[%c4_119, %c0_120] : memref<8x32xf32, #tpu.memory_space<vmem>>, vector<1x32xf32>
    %260 = vector.broadcast %258 : vector<8x1xf32> to vector<8x32xf32>
    %261 = vector.broadcast %259 : vector<1x32xf32> to vector<8x32xf32>
    %262 = arith.mulf %260, %261 : vector<8x32xf32>
    %263 = arith.addf %212, %262 : vector<8x32xf32>
    %c5_121 = arith.constant 5 : index
    %c0_122 = arith.constant 0 : index
    %264 = memref.load %arg3[%c5_121, %c0_122] : memref<8x9xf32, #tpu.memory_space<smem>>
    %265 = vector.broadcast %264 : f32 to vector<8x384xf32>
    %266 = arith.mulf %265, %1 : vector<8x384xf32>
    %c5_123 = arith.constant 5 : index
    %c1_124 = arith.constant 1 : index
    %267 = memref.load %arg3[%c5_123, %c1_124] : memref<8x9xf32, #tpu.memory_space<smem>>
    %268 = vector.broadcast %267 : f32 to vector<8x384xf32>
    %269 = arith.mulf %268, %2 : vector<8x384xf32>
    %270 = arith.addf %266, %269 : vector<8x384xf32>
    %c5_125 = arith.constant 5 : index
    %c2_126 = arith.constant 2 : index
    %271 = memref.load %arg3[%c5_125, %c2_126] : memref<8x9xf32, #tpu.memory_space<smem>>
    %272 = vector.broadcast %271 : f32 to vector<8x384xf32>
    %273 = arith.mulf %272, %3 : vector<8x384xf32>
    %274 = arith.addf %270, %273 : vector<8x384xf32>
    %c5_127 = arith.constant 5 : index
    %c3_128 = arith.constant 3 : index
    %275 = memref.load %arg3[%c5_127, %c3_128] : memref<8x9xf32, #tpu.memory_space<smem>>
    %276 = vector.broadcast %275 : f32 to vector<8x384xf32>
    %277 = arith.mulf %276, %4 : vector<8x384xf32>
    %278 = arith.addf %274, %277 : vector<8x384xf32>
    %c5_129 = arith.constant 5 : index
    %c4_130 = arith.constant 4 : index
    %279 = memref.load %arg3[%c5_129, %c4_130] : memref<8x9xf32, #tpu.memory_space<smem>>
    %280 = vector.broadcast %279 : f32 to vector<8x384xf32>
    %281 = arith.mulf %280, %5 : vector<8x384xf32>
    %282 = arith.addf %278, %281 : vector<8x384xf32>
    %c5_131 = arith.constant 5 : index
    %c5_132 = arith.constant 5 : index
    %283 = memref.load %arg3[%c5_131, %c5_132] : memref<8x9xf32, #tpu.memory_space<smem>>
    %284 = vector.broadcast %283 : f32 to vector<8x384xf32>
    %285 = arith.mulf %284, %6 : vector<8x384xf32>
    %286 = arith.addf %282, %285 : vector<8x384xf32>
    %c5_133 = arith.constant 5 : index
    %c6_134 = arith.constant 6 : index
    %287 = memref.load %arg3[%c5_133, %c6_134] : memref<8x9xf32, #tpu.memory_space<smem>>
    %288 = vector.broadcast %287 : f32 to vector<8x384xf32>
    %289 = arith.mulf %288, %7 : vector<8x384xf32>
    %290 = arith.addf %286, %289 : vector<8x384xf32>
    %c5_135 = arith.constant 5 : index
    %c7_136 = arith.constant 7 : index
    %291 = memref.load %arg3[%c5_135, %c7_136] : memref<8x9xf32, #tpu.memory_space<smem>>
    %292 = vector.broadcast %291 : f32 to vector<8x384xf32>
    %293 = arith.mulf %292, %8 : vector<8x384xf32>
    %294 = arith.addf %290, %293 : vector<8x384xf32>
    %c5_137 = arith.constant 5 : index
    %c8_138 = arith.constant 8 : index
    %295 = memref.load %arg3[%c5_137, %c8_138] : memref<8x9xf32, #tpu.memory_space<smem>>
    %296 = vector.broadcast %295 : f32 to vector<8x384xf32>
    %297 = arith.mulf %296, %9 : vector<8x384xf32>
    %298 = arith.addf %294, %297 : vector<8x384xf32>
    %c5_139 = arith.constant 5 : index
    %299 = memref.load %arg4[%c5_139] : memref<8xf32, #tpu.memory_space<smem>>
    %300 = vector.broadcast %299 : f32 to vector<8x384xf32>
    %301 = arith.addf %298, %300 : vector<8x384xf32>
    %cst_140 = arith.constant 0.000000e+00 : f32
    %302 = vector.broadcast %cst_140 : f32 to vector<8x384xf32>
    %303 = arith.maximumf %301, %302 : vector<8x384xf32>
    %304 = vector.broadcast %0 : vector<1x384xf32> to vector<8x384xf32>
    %305 = arith.mulf %303, %304 : vector<8x384xf32>
    %cst_141 = arith.constant dense<0.000000e+00> : vector<8xf32>
    %306 = vector.multi_reduction <add>, %305, %cst_141 [1] : vector<8x384xf32> to vector<8xf32>
    %307 = vector.shape_cast %306 : vector<8xf32> to vector<8x1xf32>
    %cst_142 = arith.constant 3.906250e-03 : f32
    %308 = vector.broadcast %cst_142 : f32 to vector<8x1xf32>
    %309 = arith.mulf %307, %308 : vector<8x1xf32>
    %c5_143 = arith.constant 5 : index
    %c0_144 = arith.constant 0 : index
    %310 = vector.load %arg5[%c5_143, %c0_144] : memref<8x32xf32, #tpu.memory_space<vmem>>, vector<1x32xf32>
    %311 = vector.broadcast %309 : vector<8x1xf32> to vector<8x32xf32>
    %312 = vector.broadcast %310 : vector<1x32xf32> to vector<8x32xf32>
    %313 = arith.mulf %311, %312 : vector<8x32xf32>
    %314 = arith.addf %263, %313 : vector<8x32xf32>
    %c6_145 = arith.constant 6 : index
    %c0_146 = arith.constant 0 : index
    %315 = memref.load %arg3[%c6_145, %c0_146] : memref<8x9xf32, #tpu.memory_space<smem>>
    %316 = vector.broadcast %315 : f32 to vector<8x384xf32>
    %317 = arith.mulf %316, %1 : vector<8x384xf32>
    %c6_147 = arith.constant 6 : index
    %c1_148 = arith.constant 1 : index
    %318 = memref.load %arg3[%c6_147, %c1_148] : memref<8x9xf32, #tpu.memory_space<smem>>
    %319 = vector.broadcast %318 : f32 to vector<8x384xf32>
    %320 = arith.mulf %319, %2 : vector<8x384xf32>
    %321 = arith.addf %317, %320 : vector<8x384xf32>
    %c6_149 = arith.constant 6 : index
    %c2_150 = arith.constant 2 : index
    %322 = memref.load %arg3[%c6_149, %c2_150] : memref<8x9xf32, #tpu.memory_space<smem>>
    %323 = vector.broadcast %322 : f32 to vector<8x384xf32>
    %324 = arith.mulf %323, %3 : vector<8x384xf32>
    %325 = arith.addf %321, %324 : vector<8x384xf32>
    %c6_151 = arith.constant 6 : index
    %c3_152 = arith.constant 3 : index
    %326 = memref.load %arg3[%c6_151, %c3_152] : memref<8x9xf32, #tpu.memory_space<smem>>
    %327 = vector.broadcast %326 : f32 to vector<8x384xf32>
    %328 = arith.mulf %327, %4 : vector<8x384xf32>
    %329 = arith.addf %325, %328 : vector<8x384xf32>
    %c6_153 = arith.constant 6 : index
    %c4_154 = arith.constant 4 : index
    %330 = memref.load %arg3[%c6_153, %c4_154] : memref<8x9xf32, #tpu.memory_space<smem>>
    %331 = vector.broadcast %330 : f32 to vector<8x384xf32>
    %332 = arith.mulf %331, %5 : vector<8x384xf32>
    %333 = arith.addf %329, %332 : vector<8x384xf32>
    %c6_155 = arith.constant 6 : index
    %c5_156 = arith.constant 5 : index
    %334 = memref.load %arg3[%c6_155, %c5_156] : memref<8x9xf32, #tpu.memory_space<smem>>
    %335 = vector.broadcast %334 : f32 to vector<8x384xf32>
    %336 = arith.mulf %335, %6 : vector<8x384xf32>
    %337 = arith.addf %333, %336 : vector<8x384xf32>
    %c6_157 = arith.constant 6 : index
    %c6_158 = arith.constant 6 : index
    %338 = memref.load %arg3[%c6_157, %c6_158] : memref<8x9xf32, #tpu.memory_space<smem>>
    %339 = vector.broadcast %338 : f32 to vector<8x384xf32>
    %340 = arith.mulf %339, %7 : vector<8x384xf32>
    %341 = arith.addf %337, %340 : vector<8x384xf32>
    %c6_159 = arith.constant 6 : index
    %c7_160 = arith.constant 7 : index
    %342 = memref.load %arg3[%c6_159, %c7_160] : memref<8x9xf32, #tpu.memory_space<smem>>
    %343 = vector.broadcast %342 : f32 to vector<8x384xf32>
    %344 = arith.mulf %343, %8 : vector<8x384xf32>
    %345 = arith.addf %341, %344 : vector<8x384xf32>
    %c6_161 = arith.constant 6 : index
    %c8_162 = arith.constant 8 : index
    %346 = memref.load %arg3[%c6_161, %c8_162] : memref<8x9xf32, #tpu.memory_space<smem>>
    %347 = vector.broadcast %346 : f32 to vector<8x384xf32>
    %348 = arith.mulf %347, %9 : vector<8x384xf32>
    %349 = arith.addf %345, %348 : vector<8x384xf32>
    %c6_163 = arith.constant 6 : index
    %350 = memref.load %arg4[%c6_163] : memref<8xf32, #tpu.memory_space<smem>>
    %351 = vector.broadcast %350 : f32 to vector<8x384xf32>
    %352 = arith.addf %349, %351 : vector<8x384xf32>
    %cst_164 = arith.constant 0.000000e+00 : f32
    %353 = vector.broadcast %cst_164 : f32 to vector<8x384xf32>
    %354 = arith.maximumf %352, %353 : vector<8x384xf32>
    %355 = vector.broadcast %0 : vector<1x384xf32> to vector<8x384xf32>
    %356 = arith.mulf %354, %355 : vector<8x384xf32>
    %cst_165 = arith.constant dense<0.000000e+00> : vector<8xf32>
    %357 = vector.multi_reduction <add>, %356, %cst_165 [1] : vector<8x384xf32> to vector<8xf32>
    %358 = vector.shape_cast %357 : vector<8xf32> to vector<8x1xf32>
    %cst_166 = arith.constant 3.906250e-03 : f32
    %359 = vector.broadcast %cst_166 : f32 to vector<8x1xf32>
    %360 = arith.mulf %358, %359 : vector<8x1xf32>
    %c6_167 = arith.constant 6 : index
    %c0_168 = arith.constant 0 : index
    %361 = vector.load %arg5[%c6_167, %c0_168] : memref<8x32xf32, #tpu.memory_space<vmem>>, vector<1x32xf32>
    %362 = vector.broadcast %360 : vector<8x1xf32> to vector<8x32xf32>
    %363 = vector.broadcast %361 : vector<1x32xf32> to vector<8x32xf32>
    %364 = arith.mulf %362, %363 : vector<8x32xf32>
    %365 = arith.addf %314, %364 : vector<8x32xf32>
    %c7_169 = arith.constant 7 : index
    %c0_170 = arith.constant 0 : index
    %366 = memref.load %arg3[%c7_169, %c0_170] : memref<8x9xf32, #tpu.memory_space<smem>>
    %367 = vector.broadcast %366 : f32 to vector<8x384xf32>
    %368 = arith.mulf %367, %1 : vector<8x384xf32>
    %c7_171 = arith.constant 7 : index
    %c1_172 = arith.constant 1 : index
    %369 = memref.load %arg3[%c7_171, %c1_172] : memref<8x9xf32, #tpu.memory_space<smem>>
    %370 = vector.broadcast %369 : f32 to vector<8x384xf32>
    %371 = arith.mulf %370, %2 : vector<8x384xf32>
    %372 = arith.addf %368, %371 : vector<8x384xf32>
    %c7_173 = arith.constant 7 : index
    %c2_174 = arith.constant 2 : index
    %373 = memref.load %arg3[%c7_173, %c2_174] : memref<8x9xf32, #tpu.memory_space<smem>>
    %374 = vector.broadcast %373 : f32 to vector<8x384xf32>
    %375 = arith.mulf %374, %3 : vector<8x384xf32>
    %376 = arith.addf %372, %375 : vector<8x384xf32>
    %c7_175 = arith.constant 7 : index
    %c3_176 = arith.constant 3 : index
    %377 = memref.load %arg3[%c7_175, %c3_176] : memref<8x9xf32, #tpu.memory_space<smem>>
    %378 = vector.broadcast %377 : f32 to vector<8x384xf32>
    %379 = arith.mulf %378, %4 : vector<8x384xf32>
    %380 = arith.addf %376, %379 : vector<8x384xf32>
    %c7_177 = arith.constant 7 : index
    %c4_178 = arith.constant 4 : index
    %381 = memref.load %arg3[%c7_177, %c4_178] : memref<8x9xf32, #tpu.memory_space<smem>>
    %382 = vector.broadcast %381 : f32 to vector<8x384xf32>
    %383 = arith.mulf %382, %5 : vector<8x384xf32>
    %384 = arith.addf %380, %383 : vector<8x384xf32>
    %c7_179 = arith.constant 7 : index
    %c5_180 = arith.constant 5 : index
    %385 = memref.load %arg3[%c7_179, %c5_180] : memref<8x9xf32, #tpu.memory_space<smem>>
    %386 = vector.broadcast %385 : f32 to vector<8x384xf32>
    %387 = arith.mulf %386, %6 : vector<8x384xf32>
    %388 = arith.addf %384, %387 : vector<8x384xf32>
    %c7_181 = arith.constant 7 : index
    %c6_182 = arith.constant 6 : index
    %389 = memref.load %arg3[%c7_181, %c6_182] : memref<8x9xf32, #tpu.memory_space<smem>>
    %390 = vector.broadcast %389 : f32 to vector<8x384xf32>
    %391 = arith.mulf %390, %7 : vector<8x384xf32>
    %392 = arith.addf %388, %391 : vector<8x384xf32>
    %c7_183 = arith.constant 7 : index
    %c7_184 = arith.constant 7 : index
    %393 = memref.load %arg3[%c7_183, %c7_184] : memref<8x9xf32, #tpu.memory_space<smem>>
    %394 = vector.broadcast %393 : f32 to vector<8x384xf32>
    %395 = arith.mulf %394, %8 : vector<8x384xf32>
    %396 = arith.addf %392, %395 : vector<8x384xf32>
    %c7_185 = arith.constant 7 : index
    %c8_186 = arith.constant 8 : index
    %397 = memref.load %arg3[%c7_185, %c8_186] : memref<8x9xf32, #tpu.memory_space<smem>>
    %398 = vector.broadcast %397 : f32 to vector<8x384xf32>
    %399 = arith.mulf %398, %9 : vector<8x384xf32>
    %400 = arith.addf %396, %399 : vector<8x384xf32>
    %c7_187 = arith.constant 7 : index
    %401 = memref.load %arg4[%c7_187] : memref<8xf32, #tpu.memory_space<smem>>
    %402 = vector.broadcast %401 : f32 to vector<8x384xf32>
    %403 = arith.addf %400, %402 : vector<8x384xf32>
    %cst_188 = arith.constant 0.000000e+00 : f32
    %404 = vector.broadcast %cst_188 : f32 to vector<8x384xf32>
    %405 = arith.maximumf %403, %404 : vector<8x384xf32>
    %406 = vector.broadcast %0 : vector<1x384xf32> to vector<8x384xf32>
    %407 = arith.mulf %405, %406 : vector<8x384xf32>
    %cst_189 = arith.constant dense<0.000000e+00> : vector<8xf32>
    %408 = vector.multi_reduction <add>, %407, %cst_189 [1] : vector<8x384xf32> to vector<8xf32>
    %409 = vector.shape_cast %408 : vector<8xf32> to vector<8x1xf32>
    %cst_190 = arith.constant 3.906250e-03 : f32
    %410 = vector.broadcast %cst_190 : f32 to vector<8x1xf32>
    %411 = arith.mulf %409, %410 : vector<8x1xf32>
    %c7_191 = arith.constant 7 : index
    %c0_192 = arith.constant 0 : index
    %412 = vector.load %arg5[%c7_191, %c0_192] : memref<8x32xf32, #tpu.memory_space<vmem>>, vector<1x32xf32>
    %413 = vector.broadcast %411 : vector<8x1xf32> to vector<8x32xf32>
    %414 = vector.broadcast %412 : vector<1x32xf32> to vector<8x32xf32>
    %415 = arith.mulf %413, %414 : vector<8x32xf32>
    %416 = arith.addf %365, %415 : vector<8x32xf32>
    %c0_193 = arith.constant 0 : index
    %c0_194 = arith.constant 0 : index
    %417 = vector.load %arg6[%c0_193, %c0_194] : memref<1x32xf32, #tpu.memory_space<vmem>>, vector<1x32xf32>
    %418 = vector.broadcast %417 : vector<1x32xf32> to vector<8x32xf32>
    %419 = arith.addf %416, %418 : vector<8x32xf32>
    %cst_195 = arith.constant 0.000000e+00 : f32
    %420 = vector.broadcast %cst_195 : f32 to vector<8x32xf32>
    %421 = arith.maximumf %419, %420 : vector<8x32xf32>
    %c0_196 = arith.constant 0 : index
    %c0_197 = arith.constant 0 : index
    %422 = vector.load %arg7[%c0_196, %c0_197] : memref<32x128xf32, #tpu.memory_space<vmem>>, vector<32x128xf32>
    %cst_198 = arith.constant dense<0.000000e+00> : vector<8x128xf32>
    %423 = tpu.matmul %421, %422, %cst_198 {dimension_numbers = #tpu.dot_dimension_numbers<[1], [0], [0], [1], [0, 0, 1, 1], [], []>} : vector<8x32xf32>, vector<32x128xf32>, vector<8x128xf32> -> vector<8x128xf32>
    %c0_199 = arith.constant 0 : index
    %c0_200 = arith.constant 0 : index
    %424 = vector.load %arg8[%c0_199, %c0_200] : memref<1x128xf32, #tpu.memory_space<vmem>>, vector<1x128xf32>
    %425 = vector.broadcast %424 : vector<1x128xf32> to vector<8x128xf32>
    %426 = arith.addf %423, %425 : vector<8x128xf32>
    %c0_201 = arith.constant 0 : index
    %c0_202 = arith.constant 0 : index
    %427 = vector.load %arg9[%c0_201, %c0_202] : memref<8x128xf32, #tpu.memory_space<vmem>>, vector<8x128xf32>
    tpu.vector_store %arg9[%c0_201, %c0_202], %426 {strides = array<i32>} : memref<8x128xf32, #tpu.memory_space<vmem>>, vector<8x128xf32>,
    return
  }
  func.func @transform_0(%arg0: i32) -> (i32, i32) {
    %c0_i32 = arith.constant 0 : i32
    %c0_i32_0 = arith.constant 0 : i32
    return %arg0, %c0_i32 : i32, i32
  }
  func.func @transform_1(%arg0: i32) -> (i32, i32) {
    %c0_i32 = arith.constant 0 : i32
    %c0_i32_0 = arith.constant 0 : i32
    %c0_i32_1 = arith.constant 0 : i32
    return %c0_i32, %c0_i32_0 : i32, i32
  }
  func.func @transform_2(%arg0: i32) -> (i32, i32) {
    %c0_i32 = arith.constant 0 : i32
    %c0_i32_0 = arith.constant 0 : i32
    %c0_i32_1 = arith.constant 0 : i32
    return %c0_i32, %c0_i32_0 : i32, i32
  }
  func.func @transform_3(%arg0: i32) -> i32 {
    %c0_i32 = arith.constant 0 : i32
    %c0_i32_0 = arith.constant 0 : i32
    return %c0_i32 : i32
  }
  func.func @transform_4(%arg0: i32) -> (i32, i32) {
    %c0_i32 = arith.constant 0 : i32
    %c0_i32_0 = arith.constant 0 : i32
    %c0_i32_1 = arith.constant 0 : i32
    return %c0_i32, %c0_i32_0 : i32, i32
  }
  func.func @transform_5(%arg0: i32) -> (i32, i32) {
    %c0_i32 = arith.constant 0 : i32
    %c0_i32_0 = arith.constant 0 : i32
    %c0_i32_1 = arith.constant 0 : i32
    return %c0_i32, %c0_i32_0 : i32, i32
  }
  func.func @transform_6(%arg0: i32) -> (i32, i32) {
    %c0_i32 = arith.constant 0 : i32
    %c0_i32_0 = arith.constant 0 : i32
    %c0_i32_1 = arith.constant 0 : i32
    return %c0_i32, %c0_i32_0 : i32, i32
  }
  func.func @transform_7(%arg0: i32) -> (i32, i32) {
    %c0_i32 = arith.constant 0 : i32
    %c0_i32_0 = arith.constant 0 : i32
    %c0_i32_1 = arith.constant 0 : i32
    return %c0_i32, %c0_i32_0 : i32, i32
  }
  func.func @transform_8(%arg0: i32) -> (i32, i32) {
    %c0_i32 = arith.constant 0 : i32
    %c0_i32_0 = arith.constant 0 : i32
    return %arg0, %c0_i32 : i32, i32
  }
}

</mosaic_0001>

<llo_original>
// kernel: cellstylenet_forward.1
$region0: #{cellstylenet_forward.1}
  #allocation0 [shape = 'u32[]', space=smem, size = 0x4, offset = 0x4, fixed_abs, tag = 'smem constant byte address 0x4 - core index']
  #allocation1 [shape = 'u32[144,128]{1,0:T(1,128)}', space=vmem, size = 0x12000, scoped, tag = 'internal scratch']
  %s0 = inlined_call_operand.vmem [shape: f32[16,640], index: 0, kind: input, shape index: {}]
  %s1 = inlined_call_operand.vmem [shape: f32[1,384], index: 1, kind: input, shape index: {}]
  %s2 = inlined_call_operand.vmem [shape: f32[8,9], index: 2, kind: input, shape index: {}]
  %s3 = inlined_call_operand.vmem [shape: f32[8], index: 3, kind: input, shape index: {}]
  %s4 = inlined_call_operand.vmem [shape: f32[8,32], index: 4, kind: input, shape index: {}]
  %s5 = inlined_call_operand.vmem [shape: f32[1,32], index: 5, kind: input, shape index: {}]
  %s6 = inlined_call_operand.vmem [shape: f32[32,128], index: 6, kind: input, shape index: {}]
  %s7 = inlined_call_operand.vmem [shape: f32[1,128], index: 7, kind: input, shape index: {}]
  %s8 = inlined_call_operand.vmem [shape: f32[16,128], index: 8, kind: output, shape index: {}]
  %s9 = sld [smem:[#allocation0]]
  $region73: #{cellstylenet_forward.1} parent=0
    _
  %s11 = ssub.s32 1, %s9
  %s12 = scalar_select 0, %s11, %s9
  $region1: #{cellstylenet_forward.1} parent=0
    #allocation2 [shape = 'u8[4096]{0}', space=smem, size = 0x1000, scoped, tag = 'input window, operand 2, single buffered']
    #allocation3 [shape = 's32[2]{0}', space=sflag, size = 0x8, scoped, tag = 'scoped memory for cellstylenet_forward.1']
    #allocation4 [shape = 'u8[512]{0}', space=smem, size = 0x200, scoped, tag = 'input window, operand 3, single buffered']
    #allocation5 [shape = 's32[1]{0}', space=sflag, size = 0x4, scoped, tag = 'scoped memory for cellstylenet_forward.1']
    %13 = vsyncpa [#allocation3], 0
    %14 = vsyncpa [#allocation5], 0
    loop: start=0, step=1, limit=4
    $region2: #{cellstylenet_forward.1} parent=1 // loop_pre_header
      _
    $region3: #{cellstylenet_forward.1} parent=1 // loop_header
      %s16 = sphi 0, %s20
      %p17 = scmp.ge.s32.totalorder %s16, 4
      %s26 = sphi 0, %s28
      %s29 = sphi 0, %s26
      %s30 = sphi 0, %s29
      %s46 = sphi 0, %s30
      %s50 = sphi 0, %s50
      %s52 = sphi 0, %s50
      %s53 = sphi 0, %s52
      %s67 = sphi 0, %s53
      %s71 = sphi 0, %s71
      %s73 = sphi 0, %s71
      %s74 = sphi 0, %s73
      %s88 = sphi 0, %s74
      %s92 = sphi 0, %s92
      %s94 = sphi 0, %s92
      %s95 = sphi 0, %s94
      %s109 = sphi 0, %s95
      %s113 = sphi 0, %s113
      %s115 = sphi 0, %s113
      %s116 = sphi 0, %s115
      %s130 = sphi 0, %s116
      %s134 = sphi 0, %s134
      %s136 = sphi 0, %s134
      %s137 = sphi 0, %s136
      %s151 = sphi 0, %s137
      %s155 = sphi 0, %s155
      %s157 = sphi 0, %s155
      %s158 = sphi 0, %s157
      %s172 = sphi 0, %s158
      %s176 = sphi 0, %s176
      %s178 = sphi 0, %s176
      %s179 = sphi 0, %s178
      %s193 = sphi 0, %s179
      %s199 = sphi 0, %s201
      %s202 = sphi 0, %s199
      %s203 = sphi 0, %s202
      %s219 = sphi 0, %s203
    $region4: #{cellstylenet_forward.1} parent=1 // loop_header_branch
      %19 = sbr.rel (%p17) target = $region8
    $region5: #{cellstylenet_forward.1} parent=1 // loop_body
      %s21 = ssub.s32 %s16, 1
      %s22 = ssub.s32 %s16, 2
      %s23 = sadd.s32 %s16, 1
      %s24 = ssub.s32 %s16, %s23
      %p25 = scmp.eq.s32.totalorder %s24, 0
      %s27 = sadd.s32 %s26, 1
      %s28 = scalar_select %p25, %s26, %s27
      %p31 = pneg %p25
      %p32 = scmp.eq.s32.totalorder %s16, 1
      %p33 = por %p31, %p32
      %p34 = scmp.ne.s32.totalorder %s26, %s29
      %p35 = scmp.eq.s32.totalorder %s16, 0
      %p36 = por %p34, %p35
      %p37 = scmp.ne.s32.totalorder %s26, %s29
      %p38 = scmp.eq.s32.totalorder %s21, 1
      %p39 = por %p37, %p38
      %p40 = scmp.ne.s32.totalorder %s29, %s30
      %p41 = scmp.eq.s32.totalorder %s21, 0
      %p42 = por %p40, %p41
      %p43 = scmp.ne.s32.totalorder %s29, %s30
      %p44 = scmp.eq.s32.totalorder %s22, 1
      %p45 = por %p43, %p44
      %p47 = scmp.ne.s32.totalorder %s30, %s46
      %p48 = scmp.eq.s32.totalorder %s22, 0
      %p49 = por %p47, %p48
      %s51 = sadd.s32 %s50, 1
      %p54 = scmp.eq.s32.totalorder %s16, 1
      %p55 = scmp.ne.s32.totalorder %s50, %s52
      %p56 = scmp.eq.s32.totalorder %s16, 0
      %p57 = por %p55, %p56
      %p58 = scmp.ne.s32.totalorder %s50, %s52
      %p59 = scmp.eq.s32.totalorder %s21, 1
      %p60 = por %p58, %p59
      %p61 = scmp.ne.s32.totalorder %s52, %s53
      %p62 = scmp.eq.s32.totalorder %s21, 0
      %p63 = por %p61, %p62
      %p64 = scmp.ne.s32.totalorder %s52, %s53
      %p65 = scmp.eq.s32.totalorder %s22, 1
      %p66 = por %p64, %p65
      %p68 = scmp.ne.s32.totalorder %s53, %s67
      %p69 = scmp.eq.s32.totalorder %s22, 0
      %p70 = por %p68, %p69
      %s72 = sadd.s32 %s71, 1
      %p75 = scmp.eq.s32.totalorder %s16, 1
      %p76 = scmp.ne.s32.totalorder %s71, %s73
      %p77 = scmp.eq.s32.totalorder %s16, 0
      %p78 = por %p76, %p77
      %p79 = scmp.ne.s32.totalorder %s71, %s73
      %p80 = scmp.eq.s32.totalorder %s21, 1
      %p81 = por %p79, %p80
      %p82 = scmp.ne.s32.totalorder %s73, %s74
      %p83 = scmp.eq.s32.totalorder %s21, 0
      %p84 = por %p82, %p83
      %p85 = scmp.ne.s32.totalorder %s73, %s74
      %p86 = scmp.eq.s32.totalorder %s22, 1
      %p87 = por %p85, %p86
      %p89 = scmp.ne.s32.totalorder %s74, %s88
      %p90 = scmp.eq.s32.totalorder %s22, 0
      %p91 = por %p89, %p90
      %s93 = sadd.s32 %s92, 1
      %p96 = scmp.eq.s32.totalorder %s16, 1
      %p97 = scmp.ne.s32.totalorder %s92, %s94
      %p98 = scmp.eq.s32.totalorder %s16, 0
      %p99 = por %p97, %p98
      %p100 = scmp.ne.s32.totalorder %s92, %s94
      %p101 = scmp.eq.s32.totalorder %s21, 1
      %p102 = por %p100, %p101
      %p103 = scmp.ne.s32.totalorder %s94, %s95
      %p104 = scmp.eq.s32.totalorder %s21, 0
      %p105 = por %p103, %p104
      %p106 = scmp.ne.s32.totalorder %s94, %s95
      %p107 = scmp.eq.s32.totalorder %s22, 1
      %p108 = por %p106, %p107
      %p110 = scmp.ne.s32.totalorder %s95, %s109
      %p111 = scmp.eq.s32.totalorder %s22, 0
      %p112 = por %p110, %p111
      %s114 = sadd.s32 %s113, 1
      %p117 = scmp.eq.s32.totalorder %s16, 1
      %p118 = scmp.ne.s32.totalorder %s113, %s115
      %p119 = scmp.eq.s32.totalorder %s16, 0
      %p120 = por %p118, %p119
      %p121 = scmp.ne.s32.totalorder %s113, %s115
      %p122 = scmp.eq.s32.totalorder %s21, 1
      %p123 = por %p121, %p122
      %p124 = scmp.ne.s32.totalorder %s115, %s116
      %p125 = scmp.eq.s32.totalorder %s21, 0
      %p126 = por %p124, %p125
      %p127 = scmp.ne.s32.totalorder %s115, %s116
      %p128 = scmp.eq.s32.totalorder %s22, 1
      %p129 = por %p127, %p128
      %p131 = scmp.ne.s32.totalorder %s116, %s130
      %p132 = scmp.eq.s32.totalorder %s22, 0
      %p133 = por %p131, %p132
      %s135 = sadd.s32 %s134, 1
      %p138 = scmp.eq.s32.totalorder %s16, 1
      %p139 = scmp.ne.s32.totalorder %s134, %s136
      %p140 = scmp.eq.s32.totalorder %s16, 0
      %p141 = por %p139, %p140
      %p142 = scmp.ne.s32.totalorder %s134, %s136
      %p143 = scmp.eq.s32.totalorder %s21, 1
      %p144 = por %p142, %p143
      %p145 = scmp.ne.s32.totalorder %s136, %s137
      %p146 = scmp.eq.s32.totalorder %s21, 0
      %p147 = por %p145, %p146
      %p148 = scmp.ne.s32.totalorder %s136, %s137
      %p149 = scmp.eq.s32.totalorder %s22, 1
      %p150 = por %p148, %p149
      %p152 = scmp.ne.s32.totalorder %s137, %s151
      %p153 = scmp.eq.s32.totalorder %s22, 0
      %p154 = por %p152, %p153
      %s156 = sadd.s32 %s155, 1
      %p159 = scmp.eq.s32.totalorder %s16, 1
      %p160 = scmp.ne.s32.totalorder %s155, %s157
      %p161 = scmp.eq.s32.totalorder %s16, 0
      %p162 = por %p160, %p161
      %p163 = scmp.ne.s32.totalorder %s155, %s157
      %p164 = scmp.eq.s32.totalorder %s21, 1
      %p165 = por %p163, %p164
      %p166 = scmp.ne.s32.totalorder %s157, %s158
      %p167 = scmp.eq.s32.totalorder %s21, 0
      %p168 = por %p166, %p167
      %p169 = scmp.ne.s32.totalorder %s157, %s158
      %p170 = scmp.eq.s32.totalorder %s22, 1
      %p171 = por %p169, %p170
      %p173 = scmp.ne.s32.totalorder %s158, %s172
      %p174 = scmp.eq.s32.totalorder %s22, 0
      %p175 = por %p173, %p174
      %s177 = sadd.s32 %s176, 1
      %p180 = scmp.eq.s32.totalorder %s16, 1
      %p181 = scmp.ne.s32.totalorder %s176, %s178
      %p182 = scmp.eq.s32.totalorder %s16, 0
      %p183 = por %p181, %p182
      %p184 = scmp.ne.s32.totalorder %s176, %s178
      %p185 = scmp.eq.s32.totalorder %s21, 1
      %p186 = por %p184, %p185
      %p187 = scmp.ne.s32.totalorder %s178, %s179
      %p188 = scmp.eq.s32.totalorder %s21, 0
      %p189 = por %p187, %p188
      %p190 = scmp.ne.s32.totalorder %s178, %s179
      %p191 = scmp.eq.s32.totalorder %s22, 1
      %p192 = por %p190, %p191
      %p194 = scmp.ne.s32.totalorder %s179, %s193
      %p195 = scmp.eq.s32.totalorder %s22, 0
      %p196 = por %p194, %p195
      %s197 = ssub.s32 %s16, %s23
      %p198 = scmp.eq.s32.totalorder %s197, 0
      %s200 = sadd.s32 %s199, 1
      %s201 = scalar_select %p198, %s199, %s200
      %p204 = pneg %p198
      %p205 = scmp.eq.s32.totalorder %s16, 1
      %p206 = por %p204, %p205
      %p207 = scmp.ne.s32.totalorder %s199, %s202
      %p208 = scmp.eq.s32.totalorder %s16, 0
      %p209 = por %p207, %p208
      %p210 = scmp.ne.s32.totalorder %s199, %s202
      %p211 = scmp.eq.s32.totalorder %s21, 1
      %p212 = por %p210, %p211
      %p213 = scmp.ne.s32.totalorder %s202, %s203
      %p214 = scmp.eq.s32.totalorder %s21, 0
      %p215 = por %p213, %p214
      %p216 = scmp.ne.s32.totalorder %s202, %s203
      %p217 = scmp.eq.s32.totalorder %s22, 1
      %p218 = por %p216, %p217
      %p220 = scmp.ne.s32.totalorder %s203, %s219
      %p221 = scmp.eq.s32.totalorder %s22, 0
      %p222 = por %p220, %p221
      %p223 = scmp.le.s32.totalorder 1, %s16
      %p224 = scmp.lt.s32.totalorder %s16, 3
      %p225 = pnand %p223, %p224
      %p226 = pneg %p225
      // Predicated region
      $region9: #{cellstylenet_forward.1} parent=5 // pred_check
        _
      $region10: #{cellstylenet_forward.1} parent=5 // pred_check_branch
        %228 = sbr.rel (%p225) target = $region12
      $region11: #{cellstylenet_forward.1} parent=5 // pred_region
        %s229 = ssub.s32 %s16, 1
        // Predicated region
        $region13: #{cellstylenet_forward.1} parent=11 // pred_check
          %p230 = pneg %p63
        $region14: #{cellstylenet_forward.1} parent=11 // pred_check_branch
          %232 = sbr.rel (%p230) target = $region16
        $region15: #{cellstylenet_forward.1} parent=11 // pred_region
          _
        $region16: #{cellstylenet_forward.1} parent=11 // pred_fallthru
          _
        // Predicated region
        $region17: #{cellstylenet_forward.1} parent=11 // pred_check
          %p233 = pneg %p84
        $region18: #{cellstylenet_forward.1} parent=11 // pred_check_branch
          %235 = sbr.rel (%p233) target = $region20
        $region19: #{cellstylenet_forward.1} parent=11 // pred_region
          %s237 = ssub.s32 128, 128
          %238 = vsyncadd [#allocation3], %s237
          %s240 = sshll.u32 %s2, 4
          %s241 = int_to_ptr.vmem [resolvable:$true] %s240
          %243 = dma.vmem_to_smem %s241, 128, [#allocation2], [#allocation3]
        $region20: #{cellstylenet_forward.1} parent=11 // pred_fallthru
          _
        // Predicated region
        $region21: #{cellstylenet_forward.1} parent=11 // pred_check
          %p244 = pneg %p105
        $region22: #{cellstylenet_forward.1} parent=11 // pred_check_branch
          %246 = sbr.rel (%p244) target = $region24
        $region23: #{cellstylenet_forward.1} parent=11 // pred_region
          %s248 = ssub.s32 16, 16
          %249 = vsyncadd [#allocation5], %s248
          %s251 = sshll.u32 %s3, 4
          %s252 = int_to_ptr.vmem [resolvable:$true] %s251
          %254 = dma.vmem_to_smem %s252, 16, [#allocation4], [#allocation5]
        $region24: #{cellstylenet_forward.1} parent=11 // pred_fallthru
          _
        // Predicated region
        $region25: #{cellstylenet_forward.1} parent=11 // pred_check
          %p255 = pneg %p126
        $region26: #{cellstylenet_forward.1} parent=11 // pred_check_branch
          %257 = sbr.rel (%p255) target = $region28
        $region27: #{cellstylenet_forward.1} parent=11 // pred_region
          _
        $region28: #{cellstylenet_forward.1} parent=11 // pred_fallthru
          _
        // Predicated region
        $region29: #{cellstylenet_forward.1} parent=11 // pred_check
          %p258 = pneg %p147
        $region30: #{cellstylenet_forward.1} parent=11 // pred_check_branch
          %260 = sbr.rel (%p258) target = $region32
        $region31: #{cellstylenet_forward.1} parent=11 // pred_region
          _
        $region32: #{cellstylenet_forward.1} parent=11 // pred_fallthru
          _
        // Predicated region
        $region33: #{cellstylenet_forward.1} parent=11 // pred_check
          %p261 = pneg %p168
        $region34: #{cellstylenet_forward.1} parent=11 // pred_check_branch
          %263 = sbr.rel (%p261) target = $region36
        $region35: #{cellstylenet_forward.1} parent=11 // pred_region
          _
        $region36: #{cellstylenet_forward.1} parent=11 // pred_fallthru
          _
        // Predicated region
        $region37: #{cellstylenet_forward.1} parent=11 // pred_check
          %p264 = pneg %p189
        $region38: #{cellstylenet_forward.1} parent=11 // pred_check_branch
          %266 = sbr.rel (%p264) target = $region40
        $region39: #{cellstylenet_forward.1} parent=11 // pred_region
          _
        $region40: #{cellstylenet_forward.1} parent=11 // pred_fallthru
          _
      $region12: #{cellstylenet_forward.1} parent=5 // pred_fallthru
        _
      %p267 = scmp.lt.s32.totalorder %s16, 2
      // Predicated region
      $region41: #{cellstylenet_forward.1} parent=5 // pred_check
        %p268 = pneg %p267
      $region42: #{cellstylenet_forward.1} parent=5 // pred_check_branch
        %270 = sbr.rel (%p268) target = $region44
      $region43: #{cellstylenet_forward.1} parent=5 // pred_region
        // Predicated region
        $region45: #{cellstylenet_forward.1} parent=43 // pred_check
          %p271 = pneg %p36
        $region46: #{cellstylenet_forward.1} parent=43 // pred_check_branch
          %273 = sbr.rel (%p271) target = $region48
        $region47: #{cellstylenet_forward.1} parent=43 // pred_region
          %p274 = scmp.lt.s32.totalorder %s16, 1
          %s275 = scalar_select %p274, %s16, 1
          %s276 = smul.addr %s275, 5
          %s277 = smul.addr %s276, 8
          %s278 = scalar_lea.vmem %s0, %s277
        $region48: #{cellstylenet_forward.1} parent=43 // pred_fallthru
          _
      $region44: #{cellstylenet_forward.1} parent=5 // pred_fallthru
        _
      %p279 = scmp.le.s32.totalorder 1, %s16
      %p280 = scmp.lt.s32.totalorder %s16, 3
      %p281 = pnand %p279, %p280
      %p282 = pneg %p281
      // Predicated region
      $region49: #{cellstylenet_forward.1} parent=5 // pred_check
        _
      $region50: #{cellstylenet_forward.1} parent=5 // pred_check_branch
        %284 = sbr.rel (%p281) target = $region52
      $region51: #{cellstylenet_forward.1} parent=5 // pred_region
        %s285 = ssub.s32 %s16, 1
        // Predicated region
        $region53: #{cellstylenet_forward.1} parent=51 // pred_check
          %p286 = pneg %p84
        $region54: #{cellstylenet_forward.1} parent=51 // pred_check_branch
          %288 = sbr.rel (%p286) target = $region56
        $region55: #{cellstylenet_forward.1} parent=51 // pred_region
          %289 = dma.done [#allocation3], 128
        $region56: #{cellstylenet_forward.1} parent=51 // pred_fallthru
          _
        // Predicated region
        $region57: #{cellstylenet_forward.1} parent=51 // pred_check
          %p290 = pneg %p105
        $region58: #{cellstylenet_forward.1} parent=51 // pred_check_branch
          %292 = sbr.rel (%p290) target = $region60
        $region59: #{cellstylenet_forward.1} parent=51 // pred_region
          %293 = dma.done [#allocation5], 16
        $region60: #{cellstylenet_forward.1} parent=51 // pred_fallthru
          _
        %294 = sfence
        %p295 = scmp.lt.s32.totalorder %s21, 1
        %s296 = scalar_select %p295, %s21, 1
        %s297 = smul.addr %s296, 5
        %s298 = smul.addr %s297, 8
        %s299 = scalar_lea.vmem %s0, %s298
        %p300 = pneg %p42
        %p301 = pneg %p39
        %p302 = pneg %p63
        %p303 = pneg %p60
        %p304 = pneg %p84
        %p305 = pneg %p81
        %p306 = pneg %p105
        %p307 = pneg %p102
        %p308 = pneg %p126
        %p309 = pneg %p123
        %p310 = pneg %p147
        %p311 = pneg %p144
        %p312 = pneg %p168
        %p313 = pneg %p165
        %p314 = pneg %p189
        %p315 = pneg %p186
        %p316 = pneg %p215
        %p317 = pneg %p212
        %p318 = scmp.lt.s32.totalorder %s21, 1
        %s319 = scalar_select %p318, %s21, 1
        %s320 = smul.addr %s319, 8
        %s321 = scalar_lea.vmem %s8, %s320
        %p322 = scmp.lt.s32.totalorder %s21, 1
        %s323 = scalar_select %p322, %s21, 1
        %s324 = smul.addr %s323, 5
        %s325 = smul.addr %s324, 8
        %s326 = scalar_lea.vmem %s0, %s325
        %p327 = scmp.lt.s32.totalorder %s21, 1
        %s328 = scalar_select %p327, %s21, 1
        %s329 = smul.addr %s328, 8
        %s330 = scalar_lea.vmem %s8, %s329
        %v331 = vld [vmem:[%s1] sm:$0x7]
        %v332 = vld [vmem:[%s326] sm:$0xff]
        %v333 = vld [vmem:[%s326 + $0x8] sm:$0xff]
        %v334 = vld [vmem:[%s326 + $0x10] sm:$0xff]
        %v335 = vld [vmem:[%s326 + $0x18] sm:$0xff]
        %v336 = vld [vmem:[%s326 + $0x8] sm:$0xff]
        %v337 = vld [vmem:[%s326 + $0x10] sm:$0xff]
        %v338 = vld [vmem:[%s326 + $0x18] sm:$0xff]
        %v339 = vld [vmem:[%s326 + $0x20] sm:$0xff]
        %s340 = sld [smem:[#allocation2]]
        %v341 = vstv %s340
        %v342 = vmul.f32 %v341, %v332
        %v343 = vmul.f32 %v341, %v333
        %v344 = vmul.f32 %v341, %v334
        %v345 = vmul.f32 %v341, %v335
        %s346 = sld [smem:[#allocation2 + $0x1]]
        %v347 = vstv %s346
        %v348 = vmul.f32 %v347, %v332
        %v349 = vmul.f32 %v347, %v333
        %v350 = vmul.f32 %v347, %v334
        %v351 = vmul.f32 %v347, %v335
        %356 = vrot.lane.b32.xlu0 %v348, 127
        %v357 = vpop.permute.xlu0 %356
        %358 = vrot.lane.b32.xlu0 %v349, 127
        %v359 = vpop.permute.xlu0 %358
        %360 = vrot.lane.b32.xlu0 %v350, 127
        %v361 = vpop.permute.xlu0 %360
        %362 = vrot.lane.b32.xlu0 %v351, 127
        %v363 = vpop.permute.xlu0 %362
        %vm364 = vcmask 1039360
        %v365 = vsel %vm364, %v357, %v359
        %v366 = vsel %vm364, %v359, %v361
        %v367 = vsel %vm364, %v361, %v363
        %v372 = vadd.f32 %v342, %v365
        %v373 = vadd.f32 %v343, %v366
        %v374 = vadd.f32 %v344, %v367
        %v375 = vadd.f32 %v345, %v363
        %s376 = sld [smem:[#allocation2 + $0x2]]
        %v377 = vstv %s376
        %v378 = vmul.f32 %v377, %v332
        %v379 = vmul.f32 %v377, %v333
        %v380 = vmul.f32 %v377, %v334
        %v381 = vmul.f32 %v377, %v335
        %386 = vrot.lane.b32.xlu0 %v378, 126
        %v387 = vpop.permute.xlu0 %386
        %388 = vrot.lane.b32.xlu0 %v379, 126
        %v389 = vpop.permute.xlu0 %388
        %390 = vrot.lane.b32.xlu0 %v380, 126
        %v391 = vpop.permute.xlu0 %390
        %392 = vrot.lane.b32.xlu0 %v381, 126
        %v393 = vpop.permute.xlu0 %392
        %vm394 = vcmask 1031168
        %v395 = vsel %vm394, %v387, %v389
        %v396 = vsel %vm394, %v389, %v391
        %v397 = vsel %vm394, %v391, %v393
        %v402 = vadd.f32 %v372, %v395
        %v403 = vadd.f32 %v373, %v396
        %v404 = vadd.f32 %v374, %v397
        %v405 = vadd.f32 %v375, %v393
        %s406 = sld [smem:[#allocation2 + $0x3]]
        %v407 = vstv %s406
        %v408 = vmul.f32 %v407, %v332
        %v409 = vmul.f32 %v407, %v333
        %v410 = vmul.f32 %v407, %v334
        %v411 = vmul.f32 %v407, %v335
        %416 = vrot.lane.b32.xlu0 %v408, 110
        %v417 = vpop.permute.xlu0 %416
        %418 = vrot.lane.b32.xlu0 %v409, 110
        %v419 = vpop.permute.xlu0 %418
        %420 = vrot.lane.b32.xlu0 %v410, 110
        %v421 = vpop.permute.xlu0 %420
        %422 = vrot.lane.b32.xlu0 %v411, 110
        %v423 = vpop.permute.xlu0 %422
        %vm424 = vcmask 900096
        %v425 = vsel %vm424, %v417, %v419
        %v426 = vsel %vm424, %v419, %v421
        %v427 = vsel %vm424, %v421, %v423
        %v432 = vadd.f32 %v402, %v425
        %v433 = vadd.f32 %v403, %v426
        %v434 = vadd.f32 %v404, %v427
        %v435 = vadd.f32 %v405, %v423
        %s436 = sld [smem:[#allocation2 + $0x4]]
        %v437 = vstv %s436
        %v438 = vmul.f32 %v437, %v333
        %v439 = vmul.f32 %v437, %v334
        %v440 = vmul.f32 %v437, %v335
        %444 = vrot.lane.b32.xlu0 %v438, 109
        %v445 = vpop.permute.xlu0 %444
        %446 = vrot.lane.b32.xlu0 %v439, 109
        %v447 = vpop.permute.xlu0 %446
        %448 = vrot.lane.b32.xlu0 %v440, 109
        %v449 = vpop.permute.xlu0 %448
        %vm450 = vcmask 891904
        %v451 = vsel %vm450, %v445, %v447
        %v452 = vsel %vm450, %v447, %v449
        %v457 = vadd.f32 %v432, %v445
        %v458 = vadd.f32 %v433, %v451
        %v459 = vadd.f32 %v434, %v452
        %v460 = vadd.f32 %v435, %v449
        %s461 = sld [smem:[#allocation2 + $0x5]]
        %v462 = vstv %s461
        %v463 = vmul.f32 %v462, %v336
        %v464 = vmul.f32 %v462, %v337
        %v465 = vmul.f32 %v462, %v338
        %v466 = vmul.f32 %v462, %v339
        %471 = vrot.lane.b32.xlu0 %v463, 108
        %v472 = vpop.permute.xlu0 %471
        %473 = vrot.lane.b32.xlu0 %v464, 108
        %v474 = vpop.permute.xlu0 %473
        %475 = vrot.lane.b32.xlu0 %v465, 108
        %v476 = vpop.permute.xlu0 %475
        %477 = vrot.lane.b32.xlu0 %v466, 108
        %v478 = vpop.permute.xlu0 %477
        %vm479 = vcmask 883712
        %v480 = vsel %vm479, %v472, %v474
        %v481 = vsel %vm479, %v474, %v476
        %v482 = vsel %vm479, %v476, %v478
        %v487 = vadd.f32 %v457, %v472
        %v488 = vadd.f32 %v458, %v480
        %v489 = vadd.f32 %v459, %v481
        %v490 = vadd.f32 %v460, %v482
        %s491 = sld [smem:[#allocation2 + $0x6]]
        %v492 = vstv %s491
        %v493 = vmul.f32 %v492, %v336
        %v494 = vmul.f32 %v492, %v337
        %v495 = vmul.f32 %v492, %v338
        %v496 = vmul.f32 %v492, %v339
        %501 = vrot.lane.b32.xlu0 %v493, 92
        %v502 = vpop.permute.xlu0 %501
        %503 = vrot.lane.b32.xlu0 %v494, 92
        %v504 = vpop.permute.xlu0 %503
        %505 = vrot.lane.b32.xlu0 %v495, 92
        %v506 = vpop.permute.xlu0 %505
        %507 = vrot.lane.b32.xlu0 %v496, 92
        %v508 = vpop.permute.xlu0 %507
        %vm509 = vcmask 752640
        %v510 = vsel %vm509, %v502, %v504
        %v511 = vsel %vm509, %v504, %v506
        %v512 = vsel %vm509, %v506, %v508
        %v517 = vadd.f32 %v487, %v502
        %v518 = vadd.f32 %v488, %v510
        %v519 = vadd.f32 %v489, %v511
        %v520 = vadd.f32 %v490, %v512
        %s521 = sld [smem:[#allocation2 + $0x7]]
        %v522 = vstv %s521
        %v523 = vmul.f32 %v522, %v336
        %v524 = vmul.f32 %v522, %v337
        %v525 = vmul.f32 %v522, %v338
        %v526 = vmul.f32 %v522, %v339
        %531 = vrot.lane.b32.xlu0 %v523, 91
        %v532 = vpop.permute.xlu0 %531
        %533 = vrot.lane.b32.xlu0 %v524, 91
        %v534 = vpop.permute.xlu0 %533
        %535 = vrot.lane.b32.xlu0 %v525, 91
        %v536 = vpop.permute.xlu0 %535
        %537 = vrot.lane.b32.xlu0 %v526, 91
        %v538 = vpop.permute.xlu0 %537
        %vm539 = vcmask 744448
        %v540 = vsel %vm539, %v532, %v534
        %v541 = vsel %vm539, %v534, %v536
        %v542 = vsel %vm539, %v536, %v538
        %v547 = vadd.f32 %v517, %v532
        %v548 = vadd.f32 %v518, %v540
        %v549 = vadd.f32 %v519, %v541
        %v550 = vadd.f32 %v520, %v542
        %s551 = sld [smem:[#allocation2 + $0x8]]
        %v552 = vstv %s551
        %v553 = vmul.f32 %v552, %v336
        %v554 = vmul.f32 %v552, %v337
        %v555 = vmul.f32 %v552, %v338
        %v556 = vmul.f32 %v552, %v339
        %561 = vrot.lane.b32.xlu0 %v553, 90
        %v562 = vpop.permute.xlu0 %561
        %563 = vrot.lane.b32.xlu0 %v554, 90
        %v564 = vpop.permute.xlu0 %563
        %565 = vrot.lane.b32.xlu0 %v555, 90
        %v566 = vpop.permute.xlu0 %565
        %567 = vrot.lane.b32.xlu0 %v556, 90
        %v568 = vpop.permute.xlu0 %567
        %vm569 = vcmask 736256
        %v570 = vsel %vm569, %v562, %v564
        %v571 = vsel %vm569, %v564, %v566
        %v572 = vsel %vm569, %v566, %v568
        %v577 = vadd.f32 %v547, %v562
        %v578 = vadd.f32 %v548, %v570
        %v579 = vadd.f32 %v549, %v571
        %v580 = vadd.f32 %v550, %v572
        %s581 = sld [smem:[#allocation4]]
        %v582 = vstv %s581
        %v583 = vadd.f32 %v577, %v582
        %v584 = vadd.f32 %v578, %v582
        %v585 = vadd.f32 %v579, %v582
        %v586 = vadd.f32 %v580, %v582
        %v587 = vmax.f32 %v583, 0.0
        %v588 = vmax.f32 %v584, 0.0
        %v589 = vmax.f32 %v585, 0.0
        %v590 = vmax.f32 %v586, 0.0
        %v592 = vlaneseq
        %v593 = vshrl.u32 %v592, 7
        %v594 = vsub.s32 0, %v593
        %v595 = vrot.slane %v331, %v594
        %v596 = vlaneseq
        %v597 = vshrl.u32 %v596, 7
        %v598 = vsub.s32 1, %v597
        %v599 = vrot.slane %v331, %v598
        %v600 = vlaneseq
        %v601 = vshrl.u32 %v600, 7
        %v602 = vsub.s32 2, %v601
        %v603 = vrot.slane %v331, %v602
        %604 = vrot.lane.b32.xlu0 %v595, 109
        %v605 = vpop.permute.xlu0 %604
        %606 = vrot.lane.b32.xlu0 %v599, 109
        %v607 = vpop.permute.xlu0 %606
        %608 = vrot.lane.b32.xlu0 %v603, 109
        %v609 = vpop.permute.xlu0 %608
        %v610 = vsel %vm450, %v605, %v607
        %v611 = vsel %vm450, %v607, %v609
        %v616 = vmul.f32 %v587, %v605
        %v617 = vmul.f32 %v588, %v610
        %v618 = vmul.f32 %v589, %v611
        %v619 = vmul.f32 %v590, %v609
        %624 = vrot.lane.b32.xlu0 %v616, 19
        %v625 = vpop.permute.xlu0 %624
        %626 = vrot.lane.b32.xlu0 %v617, 19
        %v627 = vpop.permute.xlu0 %626
        %628 = vrot.lane.b32.xlu0 %v618, 19
        %v629 = vpop.permute.xlu0 %628
        %630 = vrot.lane.b32.xlu0 %v619, 19
        %v631 = vpop.permute.xlu0 %630
        %vm632 = vcmask 154624
        %v633 = vsel %vm632, %v625, %v627
        %v634 = vsel %vm632, %v627, %v629
        %v635 = vsel %vm632, %v629, %v631
        %v639 = vadd.f32 %v633, %v634
        %v640 = vadd.f32 %v639, %v635
        %641 = vadd.xlane.f32.xlu0 %v640
        %v642 = vpop.xlane.xlu0 %641
        %v643 = vmul.f32 %v642, 0.00390625
        %v644 = vld [vmem:[%s4] sm:$0x1]
        %v645 = vlaneseq
        %v646 = vshrl.u32 %v645, 7
        %v647 = vsub.s32 0, %v646
        %v648 = vrot.slane %v644, %v647
        %v649 = vmul.f32 %v643, %v648
        %s650 = sld [smem:[#allocation2 + $0x80]]
        %v651 = vstv %s650
        %v652 = vmul.f32 %v651, %v332
        %v653 = vmul.f32 %v651, %v333
        %v654 = vmul.f32 %v651, %v334
        %v655 = vmul.f32 %v651, %v335
        %s656 = sld [smem:[#allocation2 + $0x81]]
        %v657 = vstv %s656
        %v658 = vmul.f32 %v657, %v332
        %v659 = vmul.f32 %v657, %v333
        %v660 = vmul.f32 %v657, %v334
        %v661 = vmul.f32 %v657, %v335
        %666 = vrot.lane.b32.xlu0 %v658, 127
        %v667 = vpop.permute.xlu0 %666
        %668 = vrot.lane.b32.xlu0 %v659, 127
        %v669 = vpop.permute.xlu0 %668
        %670 = vrot.lane.b32.xlu0 %v660, 127
        %v671 = vpop.permute.xlu0 %670
        %672 = vrot.lane.b32.xlu0 %v661, 127
        %v673 = vpop.permute.xlu0 %672
        %v674 = vsel %vm364, %v667, %v669
        %v675 = vsel %vm364, %v669, %v671
        %v676 = vsel %vm364, %v671, %v673
        %v681 = vadd.f32 %v652, %v674
        %v682 = vadd.f32 %v653, %v675
        %v683 = vadd.f32 %v654, %v676
        %v684 = vadd.f32 %v655, %v673
        %s685 = sld [smem:[#allocation2 + $0x82]]
        %v686 = vstv %s685
        %v687 = vmul.f32 %v686, %v332
        %v688 = vmul.f32 %v686, %v333
        %v689 = vmul.f32 %v686, %v334
        %v690 = vmul.f32 %v686, %v335
        %695 = vrot.lane.b32.xlu0 %v687, 126
        %v696 = vpop.permute.xlu0 %695
        %697 = vrot.lane.b32.xlu0 %v688, 126
        %v698 = vpop.permute.xlu0 %697
        %699 = vrot.lane.b32.xlu0 %v689, 126
        %v700 = vpop.permute.xlu0 %699
        %701 = vrot.lane.b32.xlu0 %v690, 126
        %v702 = vpop.permute.xlu0 %701
        %v703 = vsel %vm394, %v696, %v698
        %v704 = vsel %vm394, %v698, %v700
        %v705 = vsel %vm394, %v700, %v702
        %v710 = vadd.f32 %v681, %v703
        %v711 = vadd.f32 %v682, %v704
        %v712 = vadd.f32 %v683, %v705
        %v713 = vadd.f32 %v684, %v702
        %s714 = sld [smem:[#allocation2 + $0x83]]
        %v715 = vstv %s714
        %v716 = vmul.f32 %v715, %v332
        %v717 = vmul.f32 %v715, %v333
        %v718 = vmul.f32 %v715, %v334
        %v719 = vmul.f32 %v715, %v335
        %724 = vrot.lane.b32.xlu0 %v716, 110
        %v725 = vpop.permute.xlu0 %724
        %726 = vrot.lane.b32.xlu0 %v717, 110
        %v727 = vpop.permute.xlu0 %726
        %728 = vrot.lane.b32.xlu0 %v718, 110
        %v729 = vpop.permute.xlu0 %728
        %730 = vrot.lane.b32.xlu0 %v719, 110
        %v731 = vpop.permute.xlu0 %730
        %v732 = vsel %vm424, %v725, %v727
        %v733 = vsel %vm424, %v727, %v729
        %v734 = vsel %vm424, %v729, %v731
        %v739 = vadd.f32 %v710, %v732
        %v740 = vadd.f32 %v711, %v733
        %v741 = vadd.f32 %v712, %v734
        %v742 = vadd.f32 %v713, %v731
        %s743 = sld [smem:[#allocation2 + $0x84]]
        %v744 = vstv %s743
        %v745 = vmul.f32 %v744, %v333
        %v746 = vmul.f32 %v744, %v334
        %v747 = vmul.f32 %v744, %v335
        %751 = vrot.lane.b32.xlu0 %v745, 109
        %v752 = vpop.permute.xlu0 %751
        %753 = vrot.lane.b32.xlu0 %v746, 109
        %v754 = vpop.permute.xlu0 %753
        %755 = vrot.lane.b32.xlu0 %v747, 109
        %v756 = vpop.permute.xlu0 %755
        %v757 = vsel %vm450, %v752, %v754
        %v758 = vsel %vm450, %v754, %v756
        %v763 = vadd.f32 %v739, %v752
        %v764 = vadd.f32 %v740, %v757
        %v765 = vadd.f32 %v741, %v758
        %v766 = vadd.f32 %v742, %v756
        %s767 = sld [smem:[#allocation2 + $0x85]]
        %v768 = vstv %s767
        %v769 = vmul.f32 %v768, %v336
        %v770 = vmul.f32 %v768, %v337
        %v771 = vmul.f32 %v768, %v338
        %v772 = vmul.f32 %v768, %v339
        %777 = vrot.lane.b32.xlu0 %v769, 108
        %v778 = vpop.permute.xlu0 %777
        %779 = vrot.lane.b32.xlu0 %v770, 108
        %v780 = vpop.permute.xlu0 %779
        %781 = vrot.lane.b32.xlu0 %v771, 108
        %v782 = vpop.permute.xlu0 %781
        %783 = vrot.lane.b32.xlu0 %v772, 108
        %v784 = vpop.permute.xlu0 %783
        %v785 = vsel %vm479, %v778, %v780
        %v786 = vsel %vm479, %v780, %v782
        %v787 = vsel %vm479, %v782, %v784
        %v792 = vadd.f32 %v763, %v778
        %v793 = vadd.f32 %v764, %v785
        %v794 = vadd.f32 %v765, %v786
        %v795 = vadd.f32 %v766, %v787
        %s796 = sld [smem:[#allocation2 + $0x86]]
        %v797 = vstv %s796
        %v798 = vmul.f32 %v797, %v336
        %v799 = vmul.f32 %v797, %v337
        %v800 = vmul.f32 %v797, %v338
        %v801 = vmul.f32 %v797, %v339
        %806 = vrot.lane.b32.xlu0 %v798, 92
        %v807 = vpop.permute.xlu0 %806
        %808 = vrot.lane.b32.xlu0 %v799, 92
        %v809 = vpop.permute.xlu0 %808
        %810 = vrot.lane.b32.xlu0 %v800, 92
        %v811 = vpop.permute.xlu0 %810
        %812 = vrot.lane.b32.xlu0 %v801, 92
        %v813 = vpop.permute.xlu0 %812
        %v814 = vsel %vm509, %v807, %v809
        %v815 = vsel %vm509, %v809, %v811
        %v816 = vsel %vm509, %v811, %v813
        %v821 = vadd.f32 %v792, %v807
        %v822 = vadd.f32 %v793, %v814
        %v823 = vadd.f32 %v794, %v815
        %v824 = vadd.f32 %v795, %v816
        %s825 = sld [smem:[#allocation2 + $0x87]]
        %v826 = vstv %s825
        %v827 = vmul.f32 %v826, %v336
        %v828 = vmul.f32 %v826, %v337
        %v829 = vmul.f32 %v826, %v338
        %v830 = vmul.f32 %v826, %v339
        %835 = vrot.lane.b32.xlu0 %v827, 91
        %v836 = vpop.permute.xlu0 %835
        %837 = vrot.lane.b32.xlu0 %v828, 91
        %v838 = vpop.permute.xlu0 %837
        %839 = vrot.lane.b32.xlu0 %v829, 91
        %v840 = vpop.permute.xlu0 %839
        %841 = vrot.lane.b32.xlu0 %v830, 91
        %v842 = vpop.permute.xlu0 %841
        %v843 = vsel %vm539, %v836, %v838
        %v844 = vsel %vm539, %v838, %v840
        %v845 = vsel %vm539, %v840, %v842
        %v850 = vadd.f32 %v821, %v836
        %v851 = vadd.f32 %v822, %v843
        %v852 = vadd.f32 %v823, %v844
        %v853 = vadd.f32 %v824, %v845
        %s854 = sld [smem:[#allocation2 + $0x88]]
        %v855 = vstv %s854
        %v856 = vmul.f32 %v855, %v336
        %v857 = vmul.f32 %v855, %v337
        %v858 = vmul.f32 %v855, %v338
        %v859 = vmul.f32 %v855, %v339
        %864 = vrot.lane.b32.xlu0 %v856, 90
        %v865 = vpop.permute.xlu0 %864
        %866 = vrot.lane.b32.xlu0 %v857, 90
        %v867 = vpop.permute.xlu0 %866
        %868 = vrot.lane.b32.xlu0 %v858, 90
        %v869 = vpop.permute.xlu0 %868
        %870 = vrot.lane.b32.xlu0 %v859, 90
        %v871 = vpop.permute.xlu0 %870
        %v872 = vsel %vm569, %v865, %v867
        %v873 = vsel %vm569, %v867, %v869
        %v874 = vsel %vm569, %v869, %v871
        %v879 = vadd.f32 %v850, %v865
        %v880 = vadd.f32 %v851, %v872
        %v881 = vadd.f32 %v852, %v873
        %v882 = vadd.f32 %v853, %v874
        %s883 = sld [smem:[#allocation4 + $0x1]]
        %v884 = vstv %s883
        %v885 = vadd.f32 %v879, %v884
        %v886 = vadd.f32 %v880, %v884
        %v887 = vadd.f32 %v881, %v884
        %v888 = vadd.f32 %v882, %v884
        %v889 = vmax.f32 %v885, 0.0
        %v890 = vmax.f32 %v886, 0.0
        %v891 = vmax.f32 %v887, 0.0
        %v892 = vmax.f32 %v888, 0.0
        %v893 = vmul.f32 %v889, %v605
        %v894 = vmul.f32 %v890, %v610
        %v895 = vmul.f32 %v891, %v611
        %v896 = vmul.f32 %v892, %v609
        %901 = vrot.lane.b32.xlu0 %v893, 19
        %v902 = vpop.permute.xlu0 %901
        %903 = vrot.lane.b32.xlu0 %v894, 19
        %v904 = vpop.permute.xlu0 %903
        %905 = vrot.lane.b32.xlu0 %v895, 19
        %v906 = vpop.permute.xlu0 %905
        %907 = vrot.lane.b32.xlu0 %v896, 19
        %v908 = vpop.permute.xlu0 %907
        %v909 = vsel %vm632, %v902, %v904
        %v910 = vsel %vm632, %v904, %v906
        %v911 = vsel %vm632, %v906, %v908
        %v915 = vadd.f32 %v909, %v910
        %v916 = vadd.f32 %v915, %v911
        %917 = vadd.xlane.f32.xlu0 %v916
        %v918 = vpop.xlane.xlu0 %917
        %v919 = vmul.f32 %v918, 0.00390625
        %v920 = vld [vmem:[%s4 + $0x1] sm:$0x1]
        %v921 = vlaneseq
        %v922 = vshrl.u32 %v921, 7
        %v923 = vsub.s32 0, %v922
        %v924 = vrot.slane %v920, %v923
        %v925 = vmul.f32 %v919, %v924
        %v926 = vadd.f32 %v649, %v925
        %s927 = sld [smem:[#allocation2 + $0x100]]
        %v928 = vstv %s927
        %v929 = vmul.f32 %v928, %v332
        %v930 = vmul.f32 %v928, %v333
        %v931 = vmul.f32 %v928, %v334
        %v932 = vmul.f32 %v928, %v335
        %s933 = sld [smem:[#allocation2 + $0x101]]
        %v934 = vstv %s933
        %v935 = vmul.f32 %v934, %v332
        %v936 = vmul.f32 %v934, %v333
        %v937 = vmul.f32 %v934, %v334
        %v938 = vmul.f32 %v934, %v335
        %943 = vrot.lane.b32.xlu0 %v935, 127
        %v944 = vpop.permute.xlu0 %943
        %945 = vrot.lane.b32.xlu0 %v936, 127
        %v946 = vpop.permute.xlu0 %945
        %947 = vrot.lane.b32.xlu0 %v937, 127
        %v948 = vpop.permute.xlu0 %947
        %949 = vrot.lane.b32.xlu0 %v938, 127
        %v950 = vpop.permute.xlu0 %949
        %v951 = vsel %vm364, %v944, %v946
        %v952 = vsel %vm364, %v946, %v948
        %v953 = vsel %vm364, %v948, %v950
        %v958 = vadd.f32 %v929, %v951
        %v959 = vadd.f32 %v930, %v952
        %v960 = vadd.f32 %v931, %v953
        %v961 = vadd.f32 %v932, %v950
        %s962 = sld [smem:[#allocation2 + $0x102]]
        %v963 = vstv %s962
        %v964 = vmul.f32 %v963, %v332
        %v965 = vmul.f32 %v963, %v333
        %v966 = vmul.f32 %v963, %v334
        %v967 = vmul.f32 %v963, %v335
        %972 = vrot.lane.b32.xlu0 %v964, 126
        %v973 = vpop.permute.xlu0 %972
        %974 = vrot.lane.b32.xlu0 %v965, 126
        %v975 = vpop.permute.xlu0 %974
        %976 = vrot.lane.b32.xlu0 %v966, 126
        %v977 = vpop.permute.xlu0 %976
        %978 = vrot.lane.b32.xlu0 %v967, 126
        %v979 = vpop.permute.xlu0 %978
        %v980 = vsel %vm394, %v973, %v975
        %v981 = vsel %vm394, %v975, %v977
        %v982 = vsel %vm394, %v977, %v979
        %v987 = vadd.f32 %v958, %v980
        %v988 = vadd.f32 %v959, %v981
        %v989 = vadd.f32 %v960, %v982
        %v990 = vadd.f32 %v961, %v979
        %s991 = sld [smem:[#allocation2 + $0x103]]
        %v992 = vstv %s991
        %v993 = vmul.f32 %v992, %v332
        %v994 = vmul.f32 %v992, %v333
        %v995 = vmul.f32 %v992, %v334
        %v996 = vmul.f32 %v992, %v335
        %1001 = vrot.lane.b32.xlu0 %v993, 110
        %v1002 = vpop.permute.xlu0 %1001
        %1003 = vrot.lane.b32.xlu0 %v994, 110
        %v1004 = vpop.permute.xlu0 %1003
        %1005 = vrot.lane.b32.xlu0 %v995, 110
        %v1006 = vpop.permute.xlu0 %1005
        %1007 = vrot.lane.b32.xlu0 %v996, 110
        %v1008 = vpop.permute.xlu0 %1007
        %v1009 = vsel %vm424, %v1002, %v1004
        %v1010 = vsel %vm424, %v1004, %v1006
        %v1011 = vsel %vm424, %v1006, %v1008
        %v1016 = vadd.f32 %v987, %v1009
        %v1017 = vadd.f32 %v988, %v1010
        %v1018 = vadd.f32 %v989, %v1011
        %v1019 = vadd.f32 %v990, %v1008
        %s1020 = sld [smem:[#allocation2 + $0x104]]
        %v1021 = vstv %s1020
        %v1022 = vmul.f32 %v1021, %v333
        %v1023 = vmul.f32 %v1021, %v334
        %v1024 = vmul.f32 %v1021, %v335
        %1028 = vrot.lane.b32.xlu0 %v1022, 109
        %v1029 = vpop.permute.xlu0 %1028
        %1030 = vrot.lane.b32.xlu0 %v1023, 109
        %v1031 = vpop.permute.xlu0 %1030
        %1032 = vrot.lane.b32.xlu0 %v1024, 109
        %v1033 = vpop.permute.xlu0 %1032
        %v1034 = vsel %vm450, %v1029, %v1031
        %v1035 = vsel %vm450, %v1031, %v1033
        %v1040 = vadd.f32 %v1016, %v1029
        %v1041 = vadd.f32 %v1017, %v1034
        %v1042 = vadd.f32 %v1018, %v1035
        %v1043 = vadd.f32 %v1019, %v1033
        %s1044 = sld [smem:[#allocation2 + $0x105]]
        %v1045 = vstv %s1044
        %v1046 = vmul.f32 %v1045, %v336
        %v1047 = vmul.f32 %v1045, %v337
        %v1048 = vmul.f32 %v1045, %v338
        %v1049 = vmul.f32 %v1045, %v339
        %1054 = vrot.lane.b32.xlu0 %v1046, 108
        %v1055 = vpop.permute.xlu0 %1054
        %1056 = vrot.lane.b32.xlu0 %v1047, 108
        %v1057 = vpop.permute.xlu0 %1056
        %1058 = vrot.lane.b32.xlu0 %v1048, 108
        %v1059 = vpop.permute.xlu0 %1058
        %1060 = vrot.lane.b32.xlu0 %v1049, 108
        %v1061 = vpop.permute.xlu0 %1060
        %v1062 = vsel %vm479, %v1055, %v1057
        %v1063 = vsel %vm479, %v1057, %v1059
        %v1064 = vsel %vm479, %v1059, %v1061
        %v1069 = vadd.f32 %v1040, %v1055
        %v1070 = vadd.f32 %v1041, %v1062
        %v1071 = vadd.f32 %v1042, %v1063
        %v1072 = vadd.f32 %v1043, %v1064
        %s1073 = sld [smem:[#allocation2 + $0x106]]
        %v1074 = vstv %s1073
        %v1075 = vmul.f32 %v1074, %v336
        %v1076 = vmul.f32 %v1074, %v337
        %v1077 = vmul.f32 %v1074, %v338
        %v1078 = vmul.f32 %v1074, %v339
        %1083 = vrot.lane.b32.xlu0 %v1075, 92
        %v1084 = vpop.permute.xlu0 %1083
        %1085 = vrot.lane.b32.xlu0 %v1076, 92
        %v1086 = vpop.permute.xlu0 %1085
        %1087 = vrot.lane.b32.xlu0 %v1077, 92
        %v1088 = vpop.permute.xlu0 %1087
        %1089 = vrot.lane.b32.xlu0 %v1078, 92
        %v1090 = vpop.permute.xlu0 %1089
        %v1091 = vsel %vm509, %v1084, %v1086
        %v1092 = vsel %vm509, %v1086, %v1088
        %v1093 = vsel %vm509, %v1088, %v1090
        %v1098 = vadd.f32 %v1069, %v1084
        %v1099 = vadd.f32 %v1070, %v1091
        %v1100 = vadd.f32 %v1071, %v1092
        %v1101 = vadd.f32 %v1072, %v1093
        %s1102 = sld [smem:[#allocation2 + $0x107]]
        %v1103 = vstv %s1102
        %v1104 = vmul.f32 %v1103, %v336
        %v1105 = vmul.f32 %v1103, %v337
        %v1106 = vmul.f32 %v1103, %v338
        %v1107 = vmul.f32 %v1103, %v339
        %1112 = vrot.lane.b32.xlu0 %v1104, 91
        %v1113 = vpop.permute.xlu0 %1112
        %1114 = vrot.lane.b32.xlu0 %v1105, 91
        %v1115 = vpop.permute.xlu0 %1114
        %1116 = vrot.lane.b32.xlu0 %v1106, 91
        %v1117 = vpop.permute.xlu0 %1116
        %1118 = vrot.lane.b32.xlu0 %v1107, 91
        %v1119 = vpop.permute.xlu0 %1118
        %v1120 = vsel %vm539, %v1113, %v1115
        %v1121 = vsel %vm539, %v1115, %v1117
        %v1122 = vsel %vm539, %v1117, %v1119
        %v1127 = vadd.f32 %v1098, %v1113
        %v1128 = vadd.f32 %v1099, %v1120
        %v1129 = vadd.f32 %v1100, %v1121
        %v1130 = vadd.f32 %v1101, %v1122
        %s1131 = sld [smem:[#allocation2 + $0x108]]
        %v1132 = vstv %s1131
        %v1133 = vmul.f32 %v1132, %v336
        %v1134 = vmul.f32 %v1132, %v337
        %v1135 = vmul.f32 %v1132, %v338
        %v1136 = vmul.f32 %v1132, %v339
        %1141 = vrot.lane.b32.xlu0 %v1133, 90
        %v1142 = vpop.permute.xlu0 %1141
        %1143 = vrot.lane.b32.xlu0 %v1134, 90
        %v1144 = vpop.permute.xlu0 %1143
        %1145 = vrot.lane.b32.xlu0 %v1135, 90
        %v1146 = vpop.permute.xlu0 %1145
        %1147 = vrot.lane.b32.xlu0 %v1136, 90
        %v1148 = vpop.permute.xlu0 %1147
        %v1149 = vsel %vm569, %v1142, %v1144
        %v1150 = vsel %vm569, %v1144, %v1146
        %v1151 = vsel %vm569, %v1146, %v1148
        %v1156 = vadd.f32 %v1127, %v1142
        %v1157 = vadd.f32 %v1128, %v1149
        %v1158 = vadd.f32 %v1129, %v1150
        %v1159 = vadd.f32 %v1130, %v1151
        %s1160 = sld [smem:[#allocation4 + $0x2]]
        %v1161 = vstv %s1160
        %v1162 = vadd.f32 %v1156, %v1161
        %v1163 = vadd.f32 %v1157, %v1161
        %v1164 = vadd.f32 %v1158, %v1161
        %v1165 = vadd.f32 %v1159, %v1161
        %v1166 = vmax.f32 %v1162, 0.0
        %v1167 = vmax.f32 %v1163, 0.0
        %v1168 = vmax.f32 %v1164, 0.0
        %v1169 = vmax.f32 %v1165, 0.0
        %v1170 = vmul.f32 %v1166, %v605
        %v1171 = vmul.f32 %v1167, %v610
        %v1172 = vmul.f32 %v1168, %v611
        %v1173 = vmul.f32 %v1169, %v609
        %1178 = vrot.lane.b32.xlu0 %v1170, 19
        %v1179 = vpop.permute.xlu0 %1178
        %1180 = vrot.lane.b32.xlu0 %v1171, 19
        %v1181 = vpop.permute.xlu0 %1180
        %1182 = vrot.lane.b32.xlu0 %v1172, 19
        %v1183 = vpop.permute.xlu0 %1182
        %1184 = vrot.lane.b32.xlu0 %v1173, 19
        %v1185 = vpop.permute.xlu0 %1184
        %v1186 = vsel %vm632, %v1179, %v1181
        %v1187 = vsel %vm632, %v1181, %v1183
        %v1188 = vsel %vm632, %v1183, %v1185
        %v1192 = vadd.f32 %v1186, %v1187
        %v1193 = vadd.f32 %v1192, %v1188
        %1194 = vadd.xlane.f32.xlu0 %v1193
        %v1195 = vpop.xlane.xlu0 %1194
        %v1196 = vmul.f32 %v1195, 0.00390625
        %v1197 = vld [vmem:[%s4 + $0x2] sm:$0x1]
        %v1198 = vlaneseq
        %v1199 = vshrl.u32 %v1198, 7
        %v1200 = vsub.s32 0, %v1199
        %v1201 = vrot.slane %v1197, %v1200
        %v1202 = vmul.f32 %v1196, %v1201
        %v1203 = vadd.f32 %v926, %v1202
        %s1204 = sld [smem:[#allocation2 + $0x180]]
        %v1205 = vstv %s1204
        %v1206 = vmul.f32 %v1205, %v332
        %v1207 = vmul.f32 %v1205, %v333
        %v1208 = vmul.f32 %v1205, %v334
        %v1209 = vmul.f32 %v1205, %v335
        %s1210 = sld [smem:[#allocation2 + $0x181]]
        %v1211 = vstv %s1210
        %v1212 = vmul.f32 %v1211, %v332
        %v1213 = vmul.f32 %v1211, %v333
        %v1214 = vmul.f32 %v1211, %v334
        %v1215 = vmul.f32 %v1211, %v335
        %1220 = vrot.lane.b32.xlu0 %v1212, 127
        %v1221 = vpop.permute.xlu0 %1220
        %1222 = vrot.lane.b32.xlu0 %v1213, 127
        %v1223 = vpop.permute.xlu0 %1222
        %1224 = vrot.lane.b32.xlu0 %v1214, 127
        %v1225 = vpop.permute.xlu0 %1224
        %1226 = vrot.lane.b32.xlu0 %v1215, 127
        %v1227 = vpop.permute.xlu0 %1226
        %v1228 = vsel %vm364, %v1221, %v1223
        %v1229 = vsel %vm364, %v1223, %v1225
        %v1230 = vsel %vm364, %v1225, %v1227
        %v1235 = vadd.f32 %v1206, %v1228
        %v1236 = vadd.f32 %v1207, %v1229
        %v1237 = vadd.f32 %v1208, %v1230
        %v1238 = vadd.f32 %v1209, %v1227
        %s1239 = sld [smem:[#allocation2 + $0x182]]
        %v1240 = vstv %s1239
        %v1241 = vmul.f32 %v1240, %v332
        %v1242 = vmul.f32 %v1240, %v333
        %v1243 = vmul.f32 %v1240, %v334
        %v1244 = vmul.f32 %v1240, %v335
        %1249 = vrot.lane.b32.xlu0 %v1241, 126
        %v1250 = vpop.permute.xlu0 %1249
        %1251 = vrot.lane.b32.xlu0 %v1242, 126
        %v1252 = vpop.permute.xlu0 %1251
        %1253 = vrot.lane.b32.xlu0 %v1243, 126
        %v1254 = vpop.permute.xlu0 %1253
        %1255 = vrot.lane.b32.xlu0 %v1244, 126
        %v1256 = vpop.permute.xlu0 %1255
        %v1257 = vsel %vm394, %v1250, %v1252
        %v1258 = vsel %vm394, %v1252, %v1254
        %v1259 = vsel %vm394, %v1254, %v1256
        %v1264 = vadd.f32 %v1235, %v1257
        %v1265 = vadd.f32 %v1236, %v1258
        %v1266 = vadd.f32 %v1237, %v1259
        %v1267 = vadd.f32 %v1238, %v1256
        %s1268 = sld [smem:[#allocation2 + $0x183]]
        %v1269 = vstv %s1268
        %v1270 = vmul.f32 %v1269, %v332
        %v1271 = vmul.f32 %v1269, %v333
        %v1272 = vmul.f32 %v1269, %v334
        %v1273 = vmul.f32 %v1269, %v335
        %1278 = vrot.lane.b32.xlu0 %v1270, 110
        %v1279 = vpop.permute.xlu0 %1278
        %1280 = vrot.lane.b32.xlu0 %v1271, 110
        %v1281 = vpop.permute.xlu0 %1280
        %1282 = vrot.lane.b32.xlu0 %v1272, 110
        %v1283 = vpop.permute.xlu0 %1282
        %1284 = vrot.lane.b32.xlu0 %v1273, 110
        %v1285 = vpop.permute.xlu0 %1284
        %v1286 = vsel %vm424, %v1279, %v1281
        %v1287 = vsel %vm424, %v1281, %v1283
        %v1288 = vsel %vm424, %v1283, %v1285
        %v1293 = vadd.f32 %v1264, %v1286
        %v1294 = vadd.f32 %v1265, %v1287
        %v1295 = vadd.f32 %v1266, %v1288
        %v1296 = vadd.f32 %v1267, %v1285
        %s1297 = sld [smem:[#allocation2 + $0x184]]
        %v1298 = vstv %s1297
        %v1299 = vmul.f32 %v1298, %v333
        %v1300 = vmul.f32 %v1298, %v334
        %v1301 = vmul.f32 %v1298, %v335
        %1305 = vrot.lane.b32.xlu0 %v1299, 109
        %v1306 = vpop.permute.xlu0 %1305
        %1307 = vrot.lane.b32.xlu0 %v1300, 109
        %v1308 = vpop.permute.xlu0 %1307
        %1309 = vrot.lane.b32.xlu0 %v1301, 109
        %v1310 = vpop.permute.xlu0 %1309
        %v1311 = vsel %vm450, %v1306, %v1308
        %v1312 = vsel %vm450, %v1308, %v1310
        %v1317 = vadd.f32 %v1293, %v1306
        %v1318 = vadd.f32 %v1294, %v1311
        %v1319 = vadd.f32 %v1295, %v1312
        %v1320 = vadd.f32 %v1296, %v1310
        %s1321 = sld [smem:[#allocation2 + $0x185]]
        %v1322 = vstv %s1321
        %v1323 = vmul.f32 %v1322, %v336
        %v1324 = vmul.f32 %v1322, %v337
        %v1325 = vmul.f32 %v1322, %v338
        %v1326 = vmul.f32 %v1322, %v339
        %1331 = vrot.lane.b32.xlu0 %v1323, 108
        %v1332 = vpop.permute.xlu0 %1331
        %1333 = vrot.lane.b32.xlu0 %v1324, 108
        %v1334 = vpop.permute.xlu0 %1333
        %1335 = vrot.lane.b32.xlu0 %v1325, 108
        %v1336 = vpop.permute.xlu0 %1335
        %1337 = vrot.lane.b32.xlu0 %v1326, 108
        %v1338 = vpop.permute.xlu0 %1337
        %v1339 = vsel %vm479, %v1332, %v1334
        %v1340 = vsel %vm479, %v1334, %v1336
        %v1341 = vsel %vm479, %v1336, %v1338
        %v1346 = vadd.f32 %v1317, %v1332
        %v1347 = vadd.f32 %v1318, %v1339
        %v1348 = vadd.f32 %v1319, %v1340
        %v1349 = vadd.f32 %v1320, %v1341
        %s1350 = sld [smem:[#allocation2 + $0x186]]
        %v1351 = vstv %s1350
        %v1352 = vmul.f32 %v1351, %v336
        %v1353 = vmul.f32 %v1351, %v337
        %v1354 = vmul.f32 %v1351, %v338
        %v1355 = vmul.f32 %v1351, %v339
        %1360 = vrot.lane.b32.xlu0 %v1352, 92
        %v1361 = vpop.permute.xlu0 %1360
        %1362 = vrot.lane.b32.xlu0 %v1353, 92
        %v1363 = vpop.permute.xlu0 %1362
        %1364 = vrot.lane.b32.xlu0 %v1354, 92
        %v1365 = vpop.permute.xlu0 %1364
        %1366 = vrot.lane.b32.xlu0 %v1355, 92
        %v1367 = vpop.permute.xlu0 %1366
        %v1368 = vsel %vm509, %v1361, %v1363
        %v1369 = vsel %vm509, %v1363, %v1365
        %v1370 = vsel %vm509, %v1365, %v1367
        %v1375 = vadd.f32 %v1346, %v1361
        %v1376 = vadd.f32 %v1347, %v1368
        %v1377 = vadd.f32 %v1348, %v1369
        %v1378 = vadd.f32 %v1349, %v1370
        %s1379 = sld [smem:[#allocation2 + $0x187]]
        %v1380 = vstv %s1379
        %v1381 = vmul.f32 %v1380, %v336
        %v1382 = vmul.f32 %v1380, %v337
        %v1383 = vmul.f32 %v1380, %v338
        %v1384 = vmul.f32 %v1380, %v339
        %1389 = vrot.lane.b32.xlu0 %v1381, 91
        %v1390 = vpop.permute.xlu0 %1389
        %1391 = vrot.lane.b32.xlu0 %v1382, 91
        %v1392 = vpop.permute.xlu0 %1391
        %1393 = vrot.lane.b32.xlu0 %v1383, 91
        %v1394 = vpop.permute.xlu0 %1393
        %1395 = vrot.lane.b32.xlu0 %v1384, 91
        %v1396 = vpop.permute.xlu0 %1395
        %v1397 = vsel %vm539, %v1390, %v1392
        %v1398 = vsel %vm539, %v1392, %v1394
        %v1399 = vsel %vm539, %v1394, %v1396
        %v1404 = vadd.f32 %v1375, %v1390
        %v1405 = vadd.f32 %v1376, %v1397
        %v1406 = vadd.f32 %v1377, %v1398
        %v1407 = vadd.f32 %v1378, %v1399
        %s1408 = sld [smem:[#allocation2 + $0x188]]
        %v1409 = vstv %s1408
        %v1410 = vmul.f32 %v1409, %v336
        %v1411 = vmul.f32 %v1409, %v337
        %v1412 = vmul.f32 %v1409, %v338
        %v1413 = vmul.f32 %v1409, %v339
        %1418 = vrot.lane.b32.xlu0 %v1410, 90
        %v1419 = vpop.permute.xlu0 %1418
        %1420 = vrot.lane.b32.xlu0 %v1411, 90
        %v1421 = vpop.permute.xlu0 %1420
        %1422 = vrot.lane.b32.xlu0 %v1412, 90
        %v1423 = vpop.permute.xlu0 %1422
        %1424 = vrot.lane.b32.xlu0 %v1413, 90
        %v1425 = vpop.permute.xlu0 %1424
        %v1426 = vsel %vm569, %v1419, %v1421
        %v1427 = vsel %vm569, %v1421, %v1423
        %v1428 = vsel %vm569, %v1423, %v1425
        %v1433 = vadd.f32 %v1404, %v1419
        %v1434 = vadd.f32 %v1405, %v1426
        %v1435 = vadd.f32 %v1406, %v1427
        %v1436 = vadd.f32 %v1407, %v1428
        %s1437 = sld [smem:[#allocation4 + $0x3]]
        %v1438 = vstv %s1437
        %v1439 = vadd.f32 %v1433, %v1438
        %v1440 = vadd.f32 %v1434, %v1438
        %v1441 = vadd.f32 %v1435, %v1438
        %v1442 = vadd.f32 %v1436, %v1438
        %v1443 = vmax.f32 %v1439, 0.0
        %v1444 = vmax.f32 %v1440, 0.0
        %v1445 = vmax.f32 %v1441, 0.0
        %v1446 = vmax.f32 %v1442, 0.0
        %v1447 = vmul.f32 %v1443, %v605
        %v1448 = vmul.f32 %v1444, %v610
        %v1449 = vmul.f32 %v1445, %v611
        %v1450 = vmul.f32 %v1446, %v609
        %1455 = vrot.lane.b32.xlu0 %v1447, 19
        %v1456 = vpop.permute.xlu0 %1455
        %1457 = vrot.lane.b32.xlu0 %v1448, 19
        %v1458 = vpop.permute.xlu0 %1457
        %1459 = vrot.lane.b32.xlu0 %v1449, 19
        %v1460 = vpop.permute.xlu0 %1459
        %1461 = vrot.lane.b32.xlu0 %v1450, 19
        %v1462 = vpop.permute.xlu0 %1461
        %v1463 = vsel %vm632, %v1456, %v1458
        %v1464 = vsel %vm632, %v1458, %v1460
        %v1465 = vsel %vm632, %v1460, %v1462
        %v1469 = vadd.f32 %v1463, %v1464
        %v1470 = vadd.f32 %v1469, %v1465
        %1471 = vadd.xlane.f32.xlu0 %v1470
        %v1472 = vpop.xlane.xlu0 %1471
        %v1473 = vmul.f32 %v1472, 0.00390625
        %v1474 = vld [vmem:[%s4 + $0x3] sm:$0x1]
        %v1475 = vlaneseq
        %v1476 = vshrl.u32 %v1475, 7
        %v1477 = vsub.s32 0, %v1476
        %v1478 = vrot.slane %v1474, %v1477
        %v1479 = vmul.f32 %v1473, %v1478
        %v1480 = vadd.f32 %v1203, %v1479
        %s1481 = sld [smem:[#allocation2 + $0x200]]
        %v1482 = vstv %s1481
        %v1483 = vmul.f32 %v1482, %v332
        %v1484 = vmul.f32 %v1482, %v333
        %v1485 = vmul.f32 %v1482, %v334
        %v1486 = vmul.f32 %v1482, %v335
        %s1487 = sld [smem:[#allocation2 + $0x201]]
        %v1488 = vstv %s1487
        %v1489 = vmul.f32 %v1488, %v332
        %v1490 = vmul.f32 %v1488, %v333
        %v1491 = vmul.f32 %v1488, %v334
        %v1492 = vmul.f32 %v1488, %v335
        %1497 = vrot.lane.b32.xlu0 %v1489, 127
        %v1498 = vpop.permute.xlu0 %1497
        %1499 = vrot.lane.b32.xlu0 %v1490, 127
        %v1500 = vpop.permute.xlu0 %1499
        %1501 = vrot.lane.b32.xlu0 %v1491, 127
        %v1502 = vpop.permute.xlu0 %1501
        %1503 = vrot.lane.b32.xlu0 %v1492, 127
        %v1504 = vpop.permute.xlu0 %1503
        %v1505 = vsel %vm364, %v1498, %v1500
        %v1506 = vsel %vm364, %v1500, %v1502
        %v1507 = vsel %vm364, %v1502, %v1504
        %v1512 = vadd.f32 %v1483, %v1505
        %v1513 = vadd.f32 %v1484, %v1506
        %v1514 = vadd.f32 %v1485, %v1507
        %v1515 = vadd.f32 %v1486, %v1504
        %s1516 = sld [smem:[#allocation2 + $0x202]]
        %v1517 = vstv %s1516
        %v1518 = vmul.f32 %v1517, %v332
        %v1519 = vmul.f32 %v1517, %v333
        %v1520 = vmul.f32 %v1517, %v334
        %v1521 = vmul.f32 %v1517, %v335
        %1526 = vrot.lane.b32.xlu0 %v1518, 126
        %v1527 = vpop.permute.xlu0 %1526
        %1528 = vrot.lane.b32.xlu0 %v1519, 126
        %v1529 = vpop.permute.xlu0 %1528
        %1530 = vrot.lane.b32.xlu0 %v1520, 126
        %v1531 = vpop.permute.xlu0 %1530
        %1532 = vrot.lane.b32.xlu0 %v1521, 126
        %v1533 = vpop.permute.xlu0 %1532
        %v1534 = vsel %vm394, %v1527, %v1529
        %v1535 = vsel %vm394, %v1529, %v1531
        %v1536 = vsel %vm394, %v1531, %v1533
        %v1541 = vadd.f32 %v1512, %v1534
        %v1542 = vadd.f32 %v1513, %v1535
        %v1543 = vadd.f32 %v1514, %v1536
        %v1544 = vadd.f32 %v1515, %v1533
        %s1545 = sld [smem:[#allocation2 + $0x203]]
        %v1546 = vstv %s1545
        %v1547 = vmul.f32 %v1546, %v332
        %v1548 = vmul.f32 %v1546, %v333
        %v1549 = vmul.f32 %v1546, %v334
        %v1550 = vmul.f32 %v1546, %v335
        %1555 = vrot.lane.b32.xlu0 %v1547, 110
        %v1556 = vpop.permute.xlu0 %1555
        %1557 = vrot.lane.b32.xlu0 %v1548, 110
        %v1558 = vpop.permute.xlu0 %1557
        %1559 = vrot.lane.b32.xlu0 %v1549, 110
        %v1560 = vpop.permute.xlu0 %1559
        %1561 = vrot.lane.b32.xlu0 %v1550, 110
        %v1562 = vpop.permute.xlu0 %1561
        %v1563 = vsel %vm424, %v1556, %v1558
        %v1564 = vsel %vm424, %v1558, %v1560
        %v1565 = vsel %vm424, %v1560, %v1562
        %v1570 = vadd.f32 %v1541, %v1563
        %v1571 = vadd.f32 %v1542, %v1564
        %v1572 = vadd.f32 %v1543, %v1565
        %v1573 = vadd.f32 %v1544, %v1562
        %s1574 = sld [smem:[#allocation2 + $0x204]]
        %v1575 = vstv %s1574
        %v1576 = vmul.f32 %v1575, %v333
        %v1577 = vmul.f32 %v1575, %v334
        %v1578 = vmul.f32 %v1575, %v335
        %1582 = vrot.lane.b32.xlu0 %v1576, 109
        %v1583 = vpop.permute.xlu0 %1582
        %1584 = vrot.lane.b32.xlu0 %v1577, 109
        %v1585 = vpop.permute.xlu0 %1584
        %1586 = vrot.lane.b32.xlu0 %v1578, 109
        %v1587 = vpop.permute.xlu0 %1586
        %v1588 = vsel %vm450, %v1583, %v1585
        %v1589 = vsel %vm450, %v1585, %v1587
        %v1594 = vadd.f32 %v1570, %v1583
        %v1595 = vadd.f32 %v1571, %v1588
        %v1596 = vadd.f32 %v1572, %v1589
        %v1597 = vadd.f32 %v1573, %v1587
        %s1598 = sld [smem:[#allocation2 + $0x205]]
        %v1599 = vstv %s1598
        %v1600 = vmul.f32 %v1599, %v336
        %v1601 = vmul.f32 %v1599, %v337
        %v1602 = vmul.f32 %v1599, %v338
        %v1603 = vmul.f32 %v1599, %v339
        %1608 = vrot.lane.b32.xlu0 %v1600, 108
        %v1609 = vpop.permute.xlu0 %1608
        %1610 = vrot.lane.b32.xlu0 %v1601, 108
        %v1611 = vpop.permute.xlu0 %1610
        %1612 = vrot.lane.b32.xlu0 %v1602, 108
        %v1613 = vpop.permute.xlu0 %1612
        %1614 = vrot.lane.b32.xlu0 %v1603, 108
        %v1615 = vpop.permute.xlu0 %1614
        %v1616 = vsel %vm479, %v1609, %v1611
        %v1617 = vsel %vm479, %v1611, %v1613
        %v1618 = vsel %vm479, %v1613, %v1615
        %v1623 = vadd.f32 %v1594, %v1609
        %v1624 = vadd.f32 %v1595, %v1616
        %v1625 = vadd.f32 %v1596, %v1617
        %v1626 = vadd.f32 %v1597, %v1618
        %s1627 = sld [smem:[#allocation2 + $0x206]]
        %v1628 = vstv %s1627
        %v1629 = vmul.f32 %v1628, %v336
        %v1630 = vmul.f32 %v1628, %v337
        %v1631 = vmul.f32 %v1628, %v338
        %v1632 = vmul.f32 %v1628, %v339
        %1637 = vrot.lane.b32.xlu0 %v1629, 92
        %v1638 = vpop.permute.xlu0 %1637
        %1639 = vrot.lane.b32.xlu0 %v1630, 92
        %v1640 = vpop.permute.xlu0 %1639
        %1641 = vrot.lane.b32.xlu0 %v1631, 92
        %v1642 = vpop.permute.xlu0 %1641
        %1643 = vrot.lane.b32.xlu0 %v1632, 92
        %v1644 = vpop.permute.xlu0 %1643
        %v1645 = vsel %vm509, %v1638, %v1640
        %v1646 = vsel %vm509, %v1640, %v1642
        %v1647 = vsel %vm509, %v1642, %v1644
        %v1652 = vadd.f32 %v1623, %v1638
        %v1653 = vadd.f32 %v1624, %v1645
        %v1654 = vadd.f32 %v1625, %v1646
        %v1655 = vadd.f32 %v1626, %v1647
        %s1656 = sld [smem:[#allocation2 + $0x207]]
        %v1657 = vstv %s1656
        %v1658 = vmul.f32 %v1657, %v336
        %v1659 = vmul.f32 %v1657, %v337
        %v1660 = vmul.f32 %v1657, %v338
        %v1661 = vmul.f32 %v1657, %v339
        %1666 = vrot.lane.b32.xlu0 %v1658, 91
        %v1667 = vpop.permute.xlu0 %1666
        %1668 = vrot.lane.b32.xlu0 %v1659, 91
        %v1669 = vpop.permute.xlu0 %1668
        %1670 = vrot.lane.b32.xlu0 %v1660, 91
        %v1671 = vpop.permute.xlu0 %1670
        %1672 = vrot.lane.b32.xlu0 %v1661, 91
        %v1673 = vpop.permute.xlu0 %1672
        %v1674 = vsel %vm539, %v1667, %v1669
        %v1675 = vsel %vm539, %v1669, %v1671
        %v1676 = vsel %vm539, %v1671, %v1673
        %v1681 = vadd.f32 %v1652, %v1667
        %v1682 = vadd.f32 %v1653, %v1674
        %v1683 = vadd.f32 %v1654, %v1675
        %v1684 = vadd.f32 %v1655, %v1676
        %s1685 = sld [smem:[#allocation2 + $0x208]]
        %v1686 = vstv %s1685
        %v1687 = vmul.f32 %v1686, %v336
        %v1688 = vmul.f32 %v1686, %v337
        %v1689 = vmul.f32 %v1686, %v338
        %v1690 = vmul.f32 %v1686, %v339
        %1695 = vrot.lane.b32.xlu0 %v1687, 90
        %v1696 = vpop.permute.xlu0 %1695
        %1697 = vrot.lane.b32.xlu0 %v1688, 90
        %v1698 = vpop.permute.xlu0 %1697
        %1699 = vrot.lane.b32.xlu0 %v1689, 90
        %v1700 = vpop.permute.xlu0 %1699
        %1701 = vrot.lane.b32.xlu0 %v1690, 90
        %v1702 = vpop.permute.xlu0 %1701
        %v1703 = vsel %vm569, %v1696, %v1698
        %v1704 = vsel %vm569, %v1698, %v1700
        %v1705 = vsel %vm569, %v1700, %v1702
        %v1710 = vadd.f32 %v1681, %v1696
        %v1711 = vadd.f32 %v1682, %v1703
        %v1712 = vadd.f32 %v1683, %v1704
        %v1713 = vadd.f32 %v1684, %v1705
        %s1714 = sld [smem:[#allocation4 + $0x4]]
        %v1715 = vstv %s1714
        %v1716 = vadd.f32 %v1710, %v1715
        %v1717 = vadd.f32 %v1711, %v1715
        %v1718 = vadd.f32 %v1712, %v1715
        %v1719 = vadd.f32 %v1713, %v1715
        %v1720 = vmax.f32 %v1716, 0.0
        %v1721 = vmax.f32 %v1717, 0.0
        %v1722 = vmax.f32 %v1718, 0.0
        %v1723 = vmax.f32 %v1719, 0.0
        %v1724 = vmul.f32 %v1720, %v605
        %v1725 = vmul.f32 %v1721, %v610
        %v1726 = vmul.f32 %v1722, %v611
        %v1727 = vmul.f32 %v1723, %v609
        %1732 = vrot.lane.b32.xlu0 %v1724, 19
        %v1733 = vpop.permute.xlu0 %1732
        %1734 = vrot.lane.b32.xlu0 %v1725, 19
        %v1735 = vpop.permute.xlu0 %1734
        %1736 = vrot.lane.b32.xlu0 %v1726, 19
        %v1737 = vpop.permute.xlu0 %1736
        %1738 = vrot.lane.b32.xlu0 %v1727, 19
        %v1739 = vpop.permute.xlu0 %1738
        %v1740 = vsel %vm632, %v1733, %v1735
        %v1741 = vsel %vm632, %v1735, %v1737
        %v1742 = vsel %vm632, %v1737, %v1739
        %v1746 = vadd.f32 %v1740, %v1741
        %v1747 = vadd.f32 %v1746, %v1742
        %1748 = vadd.xlane.f32.xlu0 %v1747
        %v1749 = vpop.xlane.xlu0 %1748
        %v1750 = vmul.f32 %v1749, 0.00390625
        %v1751 = vld [vmem:[%s4 + $0x4] sm:$0x1]
        %v1752 = vlaneseq
        %v1753 = vshrl.u32 %v1752, 7
        %v1754 = vsub.s32 0, %v1753
        %v1755 = vrot.slane %v1751, %v1754
        %v1756 = vmul.f32 %v1750, %v1755
        %v1757 = vadd.f32 %v1480, %v1756
        %s1758 = sld [smem:[#allocation2 + $0x280]]
        %v1759 = vstv %s1758
        %v1760 = vmul.f32 %v1759, %v332
        %v1761 = vmul.f32 %v1759, %v333
        %v1762 = vmul.f32 %v1759, %v334
        %v1763 = vmul.f32 %v1759, %v335
        %s1764 = sld [smem:[#allocation2 + $0x281]]
        %v1765 = vstv %s1764
        %v1766 = vmul.f32 %v1765, %v332
        %v1767 = vmul.f32 %v1765, %v333
        %v1768 = vmul.f32 %v1765, %v334
        %v1769 = vmul.f32 %v1765, %v335
        %1774 = vrot.lane.b32.xlu0 %v1766, 127
        %v1775 = vpop.permute.xlu0 %1774
        %1776 = vrot.lane.b32.xlu0 %v1767, 127
        %v1777 = vpop.permute.xlu0 %1776
        %1778 = vrot.lane.b32.xlu0 %v1768, 127
        %v1779 = vpop.permute.xlu0 %1778
        %1780 = vrot.lane.b32.xlu0 %v1769, 127
        %v1781 = vpop.permute.xlu0 %1780
        %v1782 = vsel %vm364, %v1775, %v1777
        %v1783 = vsel %vm364, %v1777, %v1779
        %v1784 = vsel %vm364, %v1779, %v1781
        %v1789 = vadd.f32 %v1760, %v1782
        %v1790 = vadd.f32 %v1761, %v1783
        %v1791 = vadd.f32 %v1762, %v1784
        %v1792 = vadd.f32 %v1763, %v1781
        %s1793 = sld [smem:[#allocation2 + $0x282]]
        %v1794 = vstv %s1793
        %v1795 = vmul.f32 %v1794, %v332
        %v1796 = vmul.f32 %v1794, %v333
        %v1797 = vmul.f32 %v1794, %v334
        %v1798 = vmul.f32 %v1794, %v335
        %1803 = vrot.lane.b32.xlu0 %v1795, 126
        %v1804 = vpop.permute.xlu0 %1803
        %1805 = vrot.lane.b32.xlu0 %v1796, 126
        %v1806 = vpop.permute.xlu0 %1805
        %1807 = vrot.lane.b32.xlu0 %v1797, 126
        %v1808 = vpop.permute.xlu0 %1807
        %1809 = vrot.lane.b32.xlu0 %v1798, 126
        %v1810 = vpop.permute.xlu0 %1809
        %v1811 = vsel %vm394, %v1804, %v1806
        %v1812 = vsel %vm394, %v1806, %v1808
        %v1813 = vsel %vm394, %v1808, %v1810
        %v1818 = vadd.f32 %v1789, %v1811
        %v1819 = vadd.f32 %v1790, %v1812
        %v1820 = vadd.f32 %v1791, %v1813
        %v1821 = vadd.f32 %v1792, %v1810
        %s1822 = sld [smem:[#allocation2 + $0x283]]
        %v1823 = vstv %s1822
        %v1824 = vmul.f32 %v1823, %v332
        %v1825 = vmul.f32 %v1823, %v333
        %v1826 = vmul.f32 %v1823, %v334
        %v1827 = vmul.f32 %v1823, %v335
        %1832 = vrot.lane.b32.xlu0 %v1824, 110
        %v1833 = vpop.permute.xlu0 %1832
        %1834 = vrot.lane.b32.xlu0 %v1825, 110
        %v1835 = vpop.permute.xlu0 %1834
        %1836 = vrot.lane.b32.xlu0 %v1826, 110
        %v1837 = vpop.permute.xlu0 %1836
        %1838 = vrot.lane.b32.xlu0 %v1827, 110
        %v1839 = vpop.permute.xlu0 %1838
        %v1840 = vsel %vm424, %v1833, %v1835
        %v1841 = vsel %vm424, %v1835, %v1837
        %v1842 = vsel %vm424, %v1837, %v1839
        %v1847 = vadd.f32 %v1818, %v1840
        %v1848 = vadd.f32 %v1819, %v1841
        %v1849 = vadd.f32 %v1820, %v1842
        %v1850 = vadd.f32 %v1821, %v1839
        %s1851 = sld [smem:[#allocation2 + $0x284]]
        %v1852 = vstv %s1851
        %v1853 = vmul.f32 %v1852, %v333
        %v1854 = vmul.f32 %v1852, %v334
        %v1855 = vmul.f32 %v1852, %v335
        %1859 = vrot.lane.b32.xlu0 %v1853, 109
        %v1860 = vpop.permute.xlu0 %1859
        %1861 = vrot.lane.b32.xlu0 %v1854, 109
        %v1862 = vpop.permute.xlu0 %1861
        %1863 = vrot.lane.b32.xlu0 %v1855, 109
        %v1864 = vpop.permute.xlu0 %1863
        %v1865 = vsel %vm450, %v1860, %v1862
        %v1866 = vsel %vm450, %v1862, %v1864
        %v1871 = vadd.f32 %v1847, %v1860
        %v1872 = vadd.f32 %v1848, %v1865
        %v1873 = vadd.f32 %v1849, %v1866
        %v1874 = vadd.f32 %v1850, %v1864
        %s1875 = sld [smem:[#allocation2 + $0x285]]
        %v1876 = vstv %s1875
        %v1877 = vmul.f32 %v1876, %v336
        %v1878 = vmul.f32 %v1876, %v337
        %v1879 = vmul.f32 %v1876, %v338
        %v1880 = vmul.f32 %v1876, %v339
        %1885 = vrot.lane.b32.xlu0 %v1877, 108
        %v1886 = vpop.permute.xlu0 %1885
        %1887 = vrot.lane.b32.xlu0 %v1878, 108
        %v1888 = vpop.permute.xlu0 %1887
        %1889 = vrot.lane.b32.xlu0 %v1879, 108
        %v1890 = vpop.permute.xlu0 %1889
        %1891 = vrot.lane.b32.xlu0 %v1880, 108
        %v1892 = vpop.permute.xlu0 %1891
        %v1893 = vsel %vm479, %v1886, %v1888
        %v1894 = vsel %vm479, %v1888, %v1890
        %v1895 = vsel %vm479, %v1890, %v1892
        %v1900 = vadd.f32 %v1871, %v1886
        %v1901 = vadd.f32 %v1872, %v1893
        %v1902 = vadd.f32 %v1873, %v1894
        %v1903 = vadd.f32 %v1874, %v1895
        %s1904 = sld [smem:[#allocation2 + $0x286]]
        %v1905 = vstv %s1904
        %v1906 = vmul.f32 %v1905, %v336
        %v1907 = vmul.f32 %v1905, %v337
        %v1908 = vmul.f32 %v1905, %v338
        %v1909 = vmul.f32 %v1905, %v339
        %1914 = vrot.lane.b32.xlu0 %v1906, 92
        %v1915 = vpop.permute.xlu0 %1914
        %1916 = vrot.lane.b32.xlu0 %v1907, 92
        %v1917 = vpop.permute.xlu0 %1916
        %1918 = vrot.lane.b32.xlu0 %v1908, 92
        %v1919 = vpop.permute.xlu0 %1918
        %1920 = vrot.lane.b32.xlu0 %v1909, 92
        %v1921 = vpop.permute.xlu0 %1920
        %v1922 = vsel %vm509, %v1915, %v1917
        %v1923 = vsel %vm509, %v1917, %v1919
        %v1924 = vsel %vm509, %v1919, %v1921
        %v1929 = vadd.f32 %v1900, %v1915
        %v1930 = vadd.f32 %v1901, %v1922
        %v1931 = vadd.f32 %v1902, %v1923
        %v1932 = vadd.f32 %v1903, %v1924
        %s1933 = sld [smem:[#allocation2 + $0x287]]
        %v1934 = vstv %s1933
        %v1935 = vmul.f32 %v1934, %v336
        %v1936 = vmul.f32 %v1934, %v337
        %v1937 = vmul.f32 %v1934, %v338
        %v1938 = vmul.f32 %v1934, %v339
        %1943 = vrot.lane.b32.xlu0 %v1935, 91
        %v1944 = vpop.permute.xlu0 %1943
        %1945 = vrot.lane.b32.xlu0 %v1936, 91
        %v1946 = vpop.permute.xlu0 %1945
        %1947 = vrot.lane.b32.xlu0 %v1937, 91
        %v1948 = vpop.permute.xlu0 %1947
        %1949 = vrot.lane.b32.xlu0 %v1938, 91
        %v1950 = vpop.permute.xlu0 %1949
        %v1951 = vsel %vm539, %v1944, %v1946
        %v1952 = vsel %vm539, %v1946, %v1948
        %v1953 = vsel %vm539, %v1948, %v1950
        %v1958 = vadd.f32 %v1929, %v1944
        %v1959 = vadd.f32 %v1930, %v1951
        %v1960 = vadd.f32 %v1931, %v1952
        %v1961 = vadd.f32 %v1932, %v1953
        %s1962 = sld [smem:[#allocation2 + $0x288]]
        %v1963 = vstv %s1962
        %v1964 = vmul.f32 %v1963, %v336
        %v1965 = vmul.f32 %v1963, %v337
        %v1966 = vmul.f32 %v1963, %v338
        %v1967 = vmul.f32 %v1963, %v339
        %1972 = vrot.lane.b32.xlu0 %v1964, 90
        %v1973 = vpop.permute.xlu0 %1972
        %1974 = vrot.lane.b32.xlu0 %v1965, 90
        %v1975 = vpop.permute.xlu0 %1974
        %1976 = vrot.lane.b32.xlu0 %v1966, 90
        %v1977 = vpop.permute.xlu0 %1976
        %1978 = vrot.lane.b32.xlu0 %v1967, 90
        %v1979 = vpop.permute.xlu0 %1978
        %v1980 = vsel %vm569, %v1973, %v1975
        %v1981 = vsel %vm569, %v1975, %v1977
        %v1982 = vsel %vm569, %v1977, %v1979
        %v1987 = vadd.f32 %v1958, %v1973
        %v1988 = vadd.f32 %v1959, %v1980
        %v1989 = vadd.f32 %v1960, %v1981
        %v1990 = vadd.f32 %v1961, %v1982
        %s1991 = sld [smem:[#allocation4 + $0x5]]
        %v1992 = vstv %s1991
        %v1993 = vadd.f32 %v1987, %v1992
        %v1994 = vadd.f32 %v1988, %v1992
        %v1995 = vadd.f32 %v1989, %v1992
        %v1996 = vadd.f32 %v1990, %v1992
        %v1997 = vmax.f32 %v1993, 0.0
        %v1998 = vmax.f32 %v1994, 0.0
        %v1999 = vmax.f32 %v1995, 0.0
        %v2000 = vmax.f32 %v1996, 0.0
        %v2001 = vmul.f32 %v1997, %v605
        %v2002 = vmul.f32 %v1998, %v610
        %v2003 = vmul.f32 %v1999, %v611
        %v2004 = vmul.f32 %v2000, %v609
        %2009 = vrot.lane.b32.xlu0 %v2001, 19
        %v2010 = vpop.permute.xlu0 %2009
        %2011 = vrot.lane.b32.xlu0 %v2002, 19
        %v2012 = vpop.permute.xlu0 %2011
        %2013 = vrot.lane.b32.xlu0 %v2003, 19
        %v2014 = vpop.permute.xlu0 %2013
        %2015 = vrot.lane.b32.xlu0 %v2004, 19
        %v2016 = vpop.permute.xlu0 %2015
        %v2017 = vsel %vm632, %v2010, %v2012
        %v2018 = vsel %vm632, %v2012, %v2014
        %v2019 = vsel %vm632, %v2014, %v2016
        %v2023 = vadd.f32 %v2017, %v2018
        %v2024 = vadd.f32 %v2023, %v2019
        %2025 = vadd.xlane.f32.xlu0 %v2024
        %v2026 = vpop.xlane.xlu0 %2025
        %v2027 = vmul.f32 %v2026, 0.00390625
        %v2028 = vld [vmem:[%s4 + $0x5] sm:$0x1]
        %v2029 = vlaneseq
        %v2030 = vshrl.u32 %v2029, 7
        %v2031 = vsub.s32 0, %v2030
        %v2032 = vrot.slane %v2028, %v2031
        %v2033 = vmul.f32 %v2027, %v2032
        %v2034 = vadd.f32 %v1757, %v2033
        %s2035 = sld [smem:[#allocation2 + $0x300]]
        %v2036 = vstv %s2035
        %v2037 = vmul.f32 %v2036, %v332
        %v2038 = vmul.f32 %v2036, %v333
        %v2039 = vmul.f32 %v2036, %v334
        %v2040 = vmul.f32 %v2036, %v335
        %s2041 = sld [smem:[#allocation2 + $0x301]]
        %v2042 = vstv %s2041
        %v2043 = vmul.f32 %v2042, %v332
        %v2044 = vmul.f32 %v2042, %v333
        %v2045 = vmul.f32 %v2042, %v334
        %v2046 = vmul.f32 %v2042, %v335
        %2051 = vrot.lane.b32.xlu0 %v2043, 127
        %v2052 = vpop.permute.xlu0 %2051
        %2053 = vrot.lane.b32.xlu0 %v2044, 127
        %v2054 = vpop.permute.xlu0 %2053
        %2055 = vrot.lane.b32.xlu0 %v2045, 127
        %v2056 = vpop.permute.xlu0 %2055
        %2057 = vrot.lane.b32.xlu0 %v2046, 127
        %v2058 = vpop.permute.xlu0 %2057
        %v2059 = vsel %vm364, %v2052, %v2054
        %v2060 = vsel %vm364, %v2054, %v2056
        %v2061 = vsel %vm364, %v2056, %v2058
        %v2066 = vadd.f32 %v2037, %v2059
        %v2067 = vadd.f32 %v2038, %v2060
        %v2068 = vadd.f32 %v2039, %v2061
        %v2069 = vadd.f32 %v2040, %v2058
        %s2070 = sld [smem:[#allocation2 + $0x302]]
        %v2071 = vstv %s2070
        %v2072 = vmul.f32 %v2071, %v332
        %v2073 = vmul.f32 %v2071, %v333
        %v2074 = vmul.f32 %v2071, %v334
        %v2075 = vmul.f32 %v2071, %v335
        %2080 = vrot.lane.b32.xlu0 %v2072, 126
        %v2081 = vpop.permute.xlu0 %2080
        %2082 = vrot.lane.b32.xlu0 %v2073, 126
        %v2083 = vpop.permute.xlu0 %2082
        %2084 = vrot.lane.b32.xlu0 %v2074, 126
        %v2085 = vpop.permute.xlu0 %2084
        %2086 = vrot.lane.b32.xlu0 %v2075, 126
        %v2087 = vpop.permute.xlu0 %2086
        %v2088 = vsel %vm394, %v2081, %v2083
        %v2089 = vsel %vm394, %v2083, %v2085
        %v2090 = vsel %vm394, %v2085, %v2087
        %v2095 = vadd.f32 %v2066, %v2088
        %v2096 = vadd.f32 %v2067, %v2089
        %v2097 = vadd.f32 %v2068, %v2090
        %v2098 = vadd.f32 %v2069, %v2087
        %s2099 = sld [smem:[#allocation2 + $0x303]]
        %v2100 = vstv %s2099
        %v2101 = vmul.f32 %v2100, %v332
        %v2102 = vmul.f32 %v2100, %v333
        %v2103 = vmul.f32 %v2100, %v334
        %v2104 = vmul.f32 %v2100, %v335
        %2109 = vrot.lane.b32.xlu0 %v2101, 110
        %v2110 = vpop.permute.xlu0 %2109
        %2111 = vrot.lane.b32.xlu0 %v2102, 110
        %v2112 = vpop.permute.xlu0 %2111
        %2113 = vrot.lane.b32.xlu0 %v2103, 110
        %v2114 = vpop.permute.xlu0 %2113
        %2115 = vrot.lane.b32.xlu0 %v2104, 110
        %v2116 = vpop.permute.xlu0 %2115
        %v2117 = vsel %vm424, %v2110, %v2112
        %v2118 = vsel %vm424, %v2112, %v2114
        %v2119 = vsel %vm424, %v2114, %v2116
        %v2124 = vadd.f32 %v2095, %v2117
        %v2125 = vadd.f32 %v2096, %v2118
        %v2126 = vadd.f32 %v2097, %v2119
        %v2127 = vadd.f32 %v2098, %v2116
        %s2128 = sld [smem:[#allocation2 + $0x304]]
        %v2129 = vstv %s2128
        %v2130 = vmul.f32 %v2129, %v333
        %v2131 = vmul.f32 %v2129, %v334
        %v2132 = vmul.f32 %v2129, %v335
        %2136 = vrot.lane.b32.xlu0 %v2130, 109
        %v2137 = vpop.permute.xlu0 %2136
        %2138 = vrot.lane.b32.xlu0 %v2131, 109
        %v2139 = vpop.permute.xlu0 %2138
        %2140 = vrot.lane.b32.xlu0 %v2132, 109
        %v2141 = vpop.permute.xlu0 %2140
        %v2142 = vsel %vm450, %v2137, %v2139
        %v2143 = vsel %vm450, %v2139, %v2141
        %v2148 = vadd.f32 %v2124, %v2137
        %v2149 = vadd.f32 %v2125, %v2142
        %v2150 = vadd.f32 %v2126, %v2143
        %v2151 = vadd.f32 %v2127, %v2141
        %s2152 = sld [smem:[#allocation2 + $0x305]]
        %v2153 = vstv %s2152
        %v2154 = vmul.f32 %v2153, %v336
        %v2155 = vmul.f32 %v2153, %v337
        %v2156 = vmul.f32 %v2153, %v338
        %v2157 = vmul.f32 %v2153, %v339
        %2162 = vrot.lane.b32.xlu0 %v2154, 108
        %v2163 = vpop.permute.xlu0 %2162
        %2164 = vrot.lane.b32.xlu0 %v2155, 108
        %v2165 = vpop.permute.xlu0 %2164
        %2166 = vrot.lane.b32.xlu0 %v2156, 108
        %v2167 = vpop.permute.xlu0 %2166
        %2168 = vrot.lane.b32.xlu0 %v2157, 108
        %v2169 = vpop.permute.xlu0 %2168
        %v2170 = vsel %vm479, %v2163, %v2165
        %v2171 = vsel %vm479, %v2165, %v2167
        %v2172 = vsel %vm479, %v2167, %v2169
        %v2177 = vadd.f32 %v2148, %v2163
        %v2178 = vadd.f32 %v2149, %v2170
        %v2179 = vadd.f32 %v2150, %v2171
        %v2180 = vadd.f32 %v2151, %v2172
        %s2181 = sld [smem:[#allocation2 + $0x306]]
        %v2182 = vstv %s2181
        %v2183 = vmul.f32 %v2182, %v336
        %v2184 = vmul.f32 %v2182, %v337
        %v2185 = vmul.f32 %v2182, %v338
        %v2186 = vmul.f32 %v2182, %v339
        %2191 = vrot.lane.b32.xlu0 %v2183, 92
        %v2192 = vpop.permute.xlu0 %2191
        %2193 = vrot.lane.b32.xlu0 %v2184, 92
        %v2194 = vpop.permute.xlu0 %2193
        %2195 = vrot.lane.b32.xlu0 %v2185, 92
        %v2196 = vpop.permute.xlu0 %2195
        %2197 = vrot.lane.b32.xlu0 %v2186, 92
        %v2198 = vpop.permute.xlu0 %2197
        %v2199 = vsel %vm509, %v2192, %v2194
        %v2200 = vsel %vm509, %v2194, %v2196
        %v2201 = vsel %vm509, %v2196, %v2198
        %v2206 = vadd.f32 %v2177, %v2192
        %v2207 = vadd.f32 %v2178, %v2199
        %v2208 = vadd.f32 %v2179, %v2200
        %v2209 = vadd.f32 %v2180, %v2201
        %s2210 = sld [smem:[#allocation2 + $0x307]]
        %v2211 = vstv %s2210
        %v2212 = vmul.f32 %v2211, %v336
        %v2213 = vmul.f32 %v2211, %v337
        %v2214 = vmul.f32 %v2211, %v338
        %v2215 = vmul.f32 %v2211, %v339
        %2220 = vrot.lane.b32.xlu0 %v2212, 91
        %v2221 = vpop.permute.xlu0 %2220
        %2222 = vrot.lane.b32.xlu0 %v2213, 91
        %v2223 = vpop.permute.xlu0 %2222
        %2224 = vrot.lane.b32.xlu0 %v2214, 91
        %v2225 = vpop.permute.xlu0 %2224
        %2226 = vrot.lane.b32.xlu0 %v2215, 91
        %v2227 = vpop.permute.xlu0 %2226
        %v2228 = vsel %vm539, %v2221, %v2223
        %v2229 = vsel %vm539, %v2223, %v2225
        %v2230 = vsel %vm539, %v2225, %v2227
        %v2235 = vadd.f32 %v2206, %v2221
        %v2236 = vadd.f32 %v2207, %v2228
        %v2237 = vadd.f32 %v2208, %v2229
        %v2238 = vadd.f32 %v2209, %v2230
        %s2239 = sld [smem:[#allocation2 + $0x308]]
        %v2240 = vstv %s2239
        %v2241 = vmul.f32 %v2240, %v336
        %v2242 = vmul.f32 %v2240, %v337
        %v2243 = vmul.f32 %v2240, %v338
        %v2244 = vmul.f32 %v2240, %v339
        %2249 = vrot.lane.b32.xlu0 %v2241, 90
        %v2250 = vpop.permute.xlu0 %2249
        %2251 = vrot.lane.b32.xlu0 %v2242, 90
        %v2252 = vpop.permute.xlu0 %2251
        %2253 = vrot.lane.b32.xlu0 %v2243, 90
        %v2254 = vpop.permute.xlu0 %2253
        %2255 = vrot.lane.b32.xlu0 %v2244, 90
        %v2256 = vpop.permute.xlu0 %2255
        %v2257 = vsel %vm569, %v2250, %v2252
        %v2258 = vsel %vm569, %v2252, %v2254
        %v2259 = vsel %vm569, %v2254, %v2256
        %v2264 = vadd.f32 %v2235, %v2250
        %v2265 = vadd.f32 %v2236, %v2257
        %v2266 = vadd.f32 %v2237, %v2258
        %v2267 = vadd.f32 %v2238, %v2259
        %s2268 = sld [smem:[#allocation4 + $0x6]]
        %v2269 = vstv %s2268
        %v2270 = vadd.f32 %v2264, %v2269
        %v2271 = vadd.f32 %v2265, %v2269
        %v2272 = vadd.f32 %v2266, %v2269
        %v2273 = vadd.f32 %v2267, %v2269
        %v2274 = vmax.f32 %v2270, 0.0
        %v2275 = vmax.f32 %v2271, 0.0
        %v2276 = vmax.f32 %v2272, 0.0
        %v2277 = vmax.f32 %v2273, 0.0
        %v2278 = vmul.f32 %v2274, %v605
        %v2279 = vmul.f32 %v2275, %v610
        %v2280 = vmul.f32 %v2276, %v611
        %v2281 = vmul.f32 %v2277, %v609
        %2286 = vrot.lane.b32.xlu0 %v2278, 19
        %v2287 = vpop.permute.xlu0 %2286
        %2288 = vrot.lane.b32.xlu0 %v2279, 19
        %v2289 = vpop.permute.xlu0 %2288
        %2290 = vrot.lane.b32.xlu0 %v2280, 19
        %v2291 = vpop.permute.xlu0 %2290
        %2292 = vrot.lane.b32.xlu0 %v2281, 19
        %v2293 = vpop.permute.xlu0 %2292
        %v2294 = vsel %vm632, %v2287, %v2289
        %v2295 = vsel %vm632, %v2289, %v2291
        %v2296 = vsel %vm632, %v2291, %v2293
        %v2300 = vadd.f32 %v2294, %v2295
        %v2301 = vadd.f32 %v2300, %v2296
        %2302 = vadd.xlane.f32.xlu0 %v2301
        %v2303 = vpop.xlane.xlu0 %2302
        %v2304 = vmul.f32 %v2303, 0.00390625
        %v2305 = vld [vmem:[%s4 + $0x6] sm:$0x1]
        %v2306 = vlaneseq
        %v2307 = vshrl.u32 %v2306, 7
        %v2308 = vsub.s32 0, %v2307
        %v2309 = vrot.slane %v2305, %v2308
        %v2310 = vmul.f32 %v2304, %v2309
        %v2311 = vadd.f32 %v2034, %v2310
        %s2312 = sld [smem:[#allocation2 + $0x380]]
        %v2313 = vstv %s2312
        %v2314 = vmul.f32 %v2313, %v332
        %v2315 = vmul.f32 %v2313, %v333
        %v2316 = vmul.f32 %v2313, %v334
        %v2317 = vmul.f32 %v2313, %v335
        %s2318 = sld [smem:[#allocation2 + $0x381]]
        %v2319 = vstv %s2318
        %v2320 = vmul.f32 %v2319, %v332
        %v2321 = vmul.f32 %v2319, %v333
        %v2322 = vmul.f32 %v2319, %v334
        %v2323 = vmul.f32 %v2319, %v335
        %2328 = vrot.lane.b32.xlu0 %v2320, 127
        %v2329 = vpop.permute.xlu0 %2328
        %2330 = vrot.lane.b32.xlu0 %v2321, 127
        %v2331 = vpop.permute.xlu0 %2330
        %2332 = vrot.lane.b32.xlu0 %v2322, 127
        %v2333 = vpop.permute.xlu0 %2332
        %2334 = vrot.lane.b32.xlu0 %v2323, 127
        %v2335 = vpop.permute.xlu0 %2334
        %v2336 = vsel %vm364, %v2329, %v2331
        %v2337 = vsel %vm364, %v2331, %v2333
        %v2338 = vsel %vm364, %v2333, %v2335
        %v2343 = vadd.f32 %v2314, %v2336
        %v2344 = vadd.f32 %v2315, %v2337
        %v2345 = vadd.f32 %v2316, %v2338
        %v2346 = vadd.f32 %v2317, %v2335
        %s2347 = sld [smem:[#allocation2 + $0x382]]
        %v2348 = vstv %s2347
        %v2349 = vmul.f32 %v2348, %v332
        %v2350 = vmul.f32 %v2348, %v333
        %v2351 = vmul.f32 %v2348, %v334
        %v2352 = vmul.f32 %v2348, %v335
        %2357 = vrot.lane.b32.xlu0 %v2349, 126
        %v2358 = vpop.permute.xlu0 %2357
        %2359 = vrot.lane.b32.xlu0 %v2350, 126
        %v2360 = vpop.permute.xlu0 %2359
        %2361 = vrot.lane.b32.xlu0 %v2351, 126
        %v2362 = vpop.permute.xlu0 %2361
        %2363 = vrot.lane.b32.xlu0 %v2352, 126
        %v2364 = vpop.permute.xlu0 %2363
        %v2365 = vsel %vm394, %v2358, %v2360
        %v2366 = vsel %vm394, %v2360, %v2362
        %v2367 = vsel %vm394, %v2362, %v2364
        %v2372 = vadd.f32 %v2343, %v2365
        %v2373 = vadd.f32 %v2344, %v2366
        %v2374 = vadd.f32 %v2345, %v2367
        %v2375 = vadd.f32 %v2346, %v2364
        %s2376 = sld [smem:[#allocation2 + $0x383]]
        %v2377 = vstv %s2376
        %v2378 = vmul.f32 %v2377, %v332
        %v2379 = vmul.f32 %v2377, %v333
        %v2380 = vmul.f32 %v2377, %v334
        %v2381 = vmul.f32 %v2377, %v335
        %2386 = vrot.lane.b32.xlu0 %v2378, 110
        %v2387 = vpop.permute.xlu0 %2386
        %2388 = vrot.lane.b32.xlu0 %v2379, 110
        %v2389 = vpop.permute.xlu0 %2388
        %2390 = vrot.lane.b32.xlu0 %v2380, 110
        %v2391 = vpop.permute.xlu0 %2390
        %2392 = vrot.lane.b32.xlu0 %v2381, 110
        %v2393 = vpop.permute.xlu0 %2392
        %v2394 = vsel %vm424, %v2387, %v2389
        %v2395 = vsel %vm424, %v2389, %v2391
        %v2396 = vsel %vm424, %v2391, %v2393
        %v2401 = vadd.f32 %v2372, %v2394
        %v2402 = vadd.f32 %v2373, %v2395
        %v2403 = vadd.f32 %v2374, %v2396
        %v2404 = vadd.f32 %v2375, %v2393
        %s2405 = sld [smem:[#allocation2 + $0x384]]
        %v2406 = vstv %s2405
        %v2407 = vmul.f32 %v2406, %v333
        %v2408 = vmul.f32 %v2406, %v334
        %v2409 = vmul.f32 %v2406, %v335
        %2413 = vrot.lane.b32.xlu0 %v2407, 109
        %v2414 = vpop.permute.xlu0 %2413
        %2415 = vrot.lane.b32.xlu0 %v2408, 109
        %v2416 = vpop.permute.xlu0 %2415
        %2417 = vrot.lane.b32.xlu0 %v2409, 109
        %v2418 = vpop.permute.xlu0 %2417
        %v2419 = vsel %vm450, %v2414, %v2416
        %v2420 = vsel %vm450, %v2416, %v2418
        %v2425 = vadd.f32 %v2401, %v2414
        %v2426 = vadd.f32 %v2402, %v2419
        %v2427 = vadd.f32 %v2403, %v2420
        %v2428 = vadd.f32 %v2404, %v2418
        %s2429 = sld [smem:[#allocation2 + $0x385]]
        %v2430 = vstv %s2429
        %v2431 = vmul.f32 %v2430, %v336
        %v2432 = vmul.f32 %v2430, %v337
        %v2433 = vmul.f32 %v2430, %v338
        %v2434 = vmul.f32 %v2430, %v339
        %2439 = vrot.lane.b32.xlu0 %v2431, 108
        %v2440 = vpop.permute.xlu0 %2439
        %2441 = vrot.lane.b32.xlu0 %v2432, 108
        %v2442 = vpop.permute.xlu0 %2441
        %2443 = vrot.lane.b32.xlu0 %v2433, 108
        %v2444 = vpop.permute.xlu0 %2443
        %2445 = vrot.lane.b32.xlu0 %v2434, 108
        %v2446 = vpop.permute.xlu0 %2445
        %v2447 = vsel %vm479, %v2440, %v2442
        %v2448 = vsel %vm479, %v2442, %v2444
        %v2449 = vsel %vm479, %v2444, %v2446
        %v2454 = vadd.f32 %v2425, %v2440
        %v2455 = vadd.f32 %v2426, %v2447
        %v2456 = vadd.f32 %v2427, %v2448
        %v2457 = vadd.f32 %v2428, %v2449
        %s2458 = sld [smem:[#allocation2 + $0x386]]
        %v2459 = vstv %s2458
        %v2460 = vmul.f32 %v2459, %v336
        %v2461 = vmul.f32 %v2459, %v337
        %v2462 = vmul.f32 %v2459, %v338
        %v2463 = vmul.f32 %v2459, %v339
        %2468 = vrot.lane.b32.xlu0 %v2460, 92
        %v2469 = vpop.permute.xlu0 %2468
        %2470 = vrot.lane.b32.xlu0 %v2461, 92
        %v2471 = vpop.permute.xlu0 %2470
        %2472 = vrot.lane.b32.xlu0 %v2462, 92
        %v2473 = vpop.permute.xlu0 %2472
        %2474 = vrot.lane.b32.xlu0 %v2463, 92
        %v2475 = vpop.permute.xlu0 %2474
        %v2476 = vsel %vm509, %v2469, %v2471
        %v2477 = vsel %vm509, %v2471, %v2473
        %v2478 = vsel %vm509, %v2473, %v2475
        %v2483 = vadd.f32 %v2454, %v2469
        %v2484 = vadd.f32 %v2455, %v2476
        %v2485 = vadd.f32 %v2456, %v2477
        %v2486 = vadd.f32 %v2457, %v2478
        %s2487 = sld [smem:[#allocation2 + $0x387]]
        %v2488 = vstv %s2487
        %v2489 = vmul.f32 %v2488, %v336
        %v2490 = vmul.f32 %v2488, %v337
        %v2491 = vmul.f32 %v2488, %v338
        %v2492 = vmul.f32 %v2488, %v339
        %2497 = vrot.lane.b32.xlu0 %v2489, 91
        %v2498 = vpop.permute.xlu0 %2497
        %2499 = vrot.lane.b32.xlu0 %v2490, 91
        %v2500 = vpop.permute.xlu0 %2499
        %2501 = vrot.lane.b32.xlu0 %v2491, 91
        %v2502 = vpop.permute.xlu0 %2501
        %2503 = vrot.lane.b32.xlu0 %v2492, 91
        %v2504 = vpop.permute.xlu0 %2503
        %v2505 = vsel %vm539, %v2498, %v2500
        %v2506 = vsel %vm539, %v2500, %v2502
        %v2507 = vsel %vm539, %v2502, %v2504
        %v2512 = vadd.f32 %v2483, %v2498
        %v2513 = vadd.f32 %v2484, %v2505
        %v2514 = vadd.f32 %v2485, %v2506
        %v2515 = vadd.f32 %v2486, %v2507
        %s2516 = sld [smem:[#allocation2 + $0x388]]
        %v2517 = vstv %s2516
        %v2518 = vmul.f32 %v2517, %v336
        %v2519 = vmul.f32 %v2517, %v337
        %v2520 = vmul.f32 %v2517, %v338
        %v2521 = vmul.f32 %v2517, %v339
        %2526 = vrot.lane.b32.xlu0 %v2518, 90
        %v2527 = vpop.permute.xlu0 %2526
        %2528 = vrot.lane.b32.xlu0 %v2519, 90
        %v2529 = vpop.permute.xlu0 %2528
        %2530 = vrot.lane.b32.xlu0 %v2520, 90
        %v2531 = vpop.permute.xlu0 %2530
        %2532 = vrot.lane.b32.xlu0 %v2521, 90
        %v2533 = vpop.permute.xlu0 %2532
        %v2534 = vsel %vm569, %v2527, %v2529
        %v2535 = vsel %vm569, %v2529, %v2531
        %v2536 = vsel %vm569, %v2531, %v2533
        %v2541 = vadd.f32 %v2512, %v2527
        %v2542 = vadd.f32 %v2513, %v2534
        %v2543 = vadd.f32 %v2514, %v2535
        %v2544 = vadd.f32 %v2515, %v2536
        %s2545 = sld [smem:[#allocation4 + $0x7]]
        %v2546 = vstv %s2545
        %v2547 = vadd.f32 %v2541, %v2546
        %v2548 = vadd.f32 %v2542, %v2546
        %v2549 = vadd.f32 %v2543, %v2546
        %v2550 = vadd.f32 %v2544, %v2546
        %v2551 = vmax.f32 %v2547, 0.0
        %v2552 = vmax.f32 %v2548, 0.0
        %v2553 = vmax.f32 %v2549, 0.0
        %v2554 = vmax.f32 %v2550, 0.0
        %v2555 = vmul.f32 %v2551, %v605
        %v2556 = vmul.f32 %v2552, %v610
        %v2557 = vmul.f32 %v2553, %v611
        %v2558 = vmul.f32 %v2554, %v609
        %2563 = vrot.lane.b32.xlu0 %v2555, 19
        %v2564 = vpop.permute.xlu0 %2563
        %2565 = vrot.lane.b32.xlu0 %v2556, 19
        %v2566 = vpop.permute.xlu0 %2565
        %2567 = vrot.lane.b32.xlu0 %v2557, 19
        %v2568 = vpop.permute.xlu0 %2567
        %2569 = vrot.lane.b32.xlu0 %v2558, 19
        %v2570 = vpop.permute.xlu0 %2569
        %v2571 = vsel %vm632, %v2564, %v2566
        %v2572 = vsel %vm632, %v2566, %v2568
        %v2573 = vsel %vm632, %v2568, %v2570
        %v2577 = vadd.f32 %v2571, %v2572
        %v2578 = vadd.f32 %v2577, %v2573
        %2579 = vadd.xlane.f32.xlu0 %v2578
        %v2580 = vpop.xlane.xlu0 %2579
        %v2581 = vmul.f32 %v2580, 0.00390625
        %v2582 = vld [vmem:[%s4 + $0x7] sm:$0x1]
        %v2583 = vlaneseq
        %v2584 = vshrl.u32 %v2583, 7
        %v2585 = vsub.s32 0, %v2584
        %v2586 = vrot.slane %v2582, %v2585
        %v2587 = vmul.f32 %v2581, %v2586
        %v2588 = vadd.f32 %v2311, %v2587
        %v2589 = vld [vmem:[%s5] sm:$0x1]
        %v2591 = vlaneseq
        %v2592 = vshrl.u32 %v2591, 7
        %v2593 = vsub.s32 0, %v2592
        %v2594 = vrot.slane %v2589, %v2593
        %v2596 = vadd.f32 %v2588, %v2594
        %v2597 = vmax.f32 %v2596, 0.0
        %v2598 = vld [vmem:[%s6] sm:$0xff]
        %v2599 = vld [vmem:[%s6 + $0x8] sm:$0xff]
        %v2600 = vld [vmem:[%s6 + $0x10] sm:$0xff]
        %v2601 = vld [vmem:[%s6 + $0x18] sm:$0xff]
        %v2602 = vld [vmem:[%s7] sm:$0x1]
        %v2604 = vlaneseq
        %v2605 = vshrl.u32 %v2604, 7
        %v2606 = vsub.s32 0, %v2605
        %v2607 = vrot.slane %v2602, %v2606
        %vm2609 = vcmask 261120
        %v2611 = vsel %vm2609, %v2597, 0
        %2613 = vmatprep.subr.mxu0 0.0
        %2614 = vmatpush1.msra.mxu0 %v2598
        %2615 = vmatprep.subr.mxu0 0.0
        %2616 = vmatpush1.msra.mxu0 %v2599
        %2617 = vmatprep.subr.mxu0 0.0
        %2618 = vmatpush1.msra.mxu0 %v2600
        %2619 = vmatprep.subr.mxu0 0.0
        %2620 = vmatpush1.msra.mxu0 %v2601
        %2621 = vmatprep.subr.mxu0 0.0
        %2622 = vmatpush1.msra.mxu0 0.0
        %2623 = vmatprep.subr.mxu0 0.0
        %2624 = vmatpush1.msra.mxu0 0.0
        %2625 = vmatprep.subr.mxu0 0.0
        %2626 = vmatpush1.msra.mxu0 0.0
        %2627 = vmatprep.subr.mxu0 0.0
        %2628 = vmatpush1.msra.mxu0 0.0
        %2629 = vmatprep.subr.mxu0 0.0
        %2630 = vmatpush1.msra.mxu0 0.0
        %2631 = vmatprep.subr.mxu0 0.0
        %2632 = vmatpush1.msra.mxu0 0.0
        %2633 = vmatprep.subr.mxu0 0.0
        %2634 = vmatpush1.msra.mxu0 0.0
        %2635 = vmatprep.subr.mxu0 0.0
        %2636 = vmatpush1.msra.mxu0 0.0
        %2637 = vmatprep.subr.mxu0 0.0
        %2638 = vmatpush1.msra.mxu0 0.0
        %2639 = vmatprep.subr.mxu0 0.0
        %2640 = vmatpush1.msra.mxu0 0.0
        %2641 = vmatprep.subr.mxu0 0.0
        %2642 = vmatpush1.msra.mxu0 0.0
        %2643 = vmatprep.subr.mxu0 0.0
        %2644 = vmatpush1.msra.mxu0 0.0
        %2645 = vmatprep.subr.mxu0 0.0
        %2646 = vmatpush1.msra.mxu0 0.0
        %2647 = vmatprep.subr.mxu0 0.0
        %2648 = vmatpush1.msra.mxu0 0.0
        %2649 = vmatprep.subr.mxu0 0.0
        %2650 = vmatpush1.msra.mxu0 0.0
        %2651 = vmatprep.subr.mxu0 0.0
        %2652 = vmatpush1.msra.mxu0 0.0
        %2653 = vmatprep.subr.mxu0 0.0
        %2654 = vmatpush1.msra.mxu0 0.0
        %2655 = vmatprep.subr.mxu0 0.0
        %2656 = vmatpush1.msra.mxu0 0.0
        %2657 = vmatprep.subr.mxu0 0.0
        %2658 = vmatpush1.msra.mxu0 0.0
        %2659 = vmatprep.subr.mxu0 0.0
        %2660 = vmatpush1.msra.mxu0 0.0
        %2661 = vmatprep.subr.mxu0 0.0
        %2662 = vmatpush1.msra.mxu0 0.0
        %2663 = vmatprep.subr.mxu0 0.0
        %2664 = vmatpush1.msra.mxu0 0.0
        %2665 = vmatprep.subr.mxu0 0.0
        %2666 = vmatpush1.msra.mxu0 0.0
        %2667 = vmatprep.subr.mxu0 0.0
        %2668 = vmatpush1.msra.mxu0 0.0
        %2669 = vmatprep.subr.mxu0 0.0
        %2670 = vmatpush1.msra.mxu0 0.0
        %2671 = vmatprep.subr.mxu0 0.0
        %2672 = vmatpush1.msra.mxu0 0.0
        %2673 = vmatprep.subr.mxu0 0.0
        %2674 = vmatpush1.msra.mxu0 0.0
        %2675 = vmatprep.subr.mxu0 0.0
        %2676 = vmatpush1.msra.mxu0 0.0
        %2677 = vmatprep.mubr.f32.mxu0 0.0
        %2678 = vmatmul.mubr.f32.gmra.mrb[0].mxu0 %v2611
        %v2679 = vpop.f32.mrb[0].mxu0
        %v2680 = vadd.f32 %v2607, %v2679
        %v2681 = vpop.f32.mrb[0].mxu0
        %2682 = vdwg.mxu0
        %2683 = vst [vmem:[%s330] sm:$0xff] %v2680
        %p2684 = scmp.lt.s32.totalorder %s21, 1
        %s2685 = scalar_select %p2684, %s21, 1
        %s2686 = smul.addr %s2685, 8
        %s2687 = scalar_lea.vmem %s8, %s2686
        // Predicated region
        $region61: #{cellstylenet_forward.1} parent=51 // pred_check
          %p2688 = pneg %p212
        $region62: #{cellstylenet_forward.1} parent=51 // pred_check_branch
          %2690 = sbr.rel (%p2688) target = $region64
        $region63: #{cellstylenet_forward.1} parent=51 // pred_region
          _
        $region64: #{cellstylenet_forward.1} parent=51 // pred_fallthru
          _
      $region52: #{cellstylenet_forward.1} parent=5 // pred_fallthru
        _
      %p2691 = scmp.le.s32.totalorder 2, %s16
      // Predicated region
      $region65: #{cellstylenet_forward.1} parent=5 // pred_check
        %p2692 = pneg %p2691
      $region66: #{cellstylenet_forward.1} parent=5 // pred_check_branch
        %2694 = sbr.rel (%p2692) target = $region68
      $region67: #{cellstylenet_forward.1} parent=5 // pred_region
        %s2695 = ssub.s32 %s16, 2
        // Predicated region
        $region69: #{cellstylenet_forward.1} parent=67 // pred_check
          %p2696 = pneg %p218
        $region70: #{cellstylenet_forward.1} parent=67 // pred_check_branch
          %2698 = sbr.rel (%p2696) target = $region72
        $region71: #{cellstylenet_forward.1} parent=67 // pred_region
          %p2699 = scmp.lt.s32.totalorder %s22, 1
          %s2700 = scalar_select %p2699, %s22, 1
          %s2701 = smul.addr %s2700, 8
          %s2702 = scalar_lea.vmem %s8, %s2701
        $region72: #{cellstylenet_forward.1} parent=67 // pred_fallthru
          _
      $region68: #{cellstylenet_forward.1} parent=5 // pred_fallthru
        _
    $region6: #{cellstylenet_forward.1} parent=1 // loop_footer
      %s20 = sadd.s32 1, %s16
    $region7: #{cellstylenet_forward.1} parent=1 // loop_footer_branch
      %15 = sbr.rel target = $region3
    $region8: #{cellstylenet_forward.1} parent=1 // loop_exit
      _
    %2703 = vsyncpa [#allocation3], 1
    %s2704 = scalar_lea.sflag [#allocation3], 1
    %2705 = vsyncpa %s2704, 1
    %2706 = vsyncpa [#allocation5], 1

</llo_original>
